<compile_context>
chip_gen: v6e
topology: v6e:2x2x1
jax: 0.10.0
libtpu: 0.0.40
codegen_flags: <defaults>
</compile_context>

<pallas_src>
import jax
import jax.numpy as jnp
from jax.experimental import pallas as pl
from jax.experimental.pallas import tpu as pltpu

N_STATES = 35          # 5 * 7 after flatten(start_dim=1)
N_ACTIONS = 5
WIDTH = 128
HALF = WIDTH // 2      # 64
LANES = 256            # padded layer-1 activation width (2 full vregs)

_PREC = jax.lax.Precision.HIGHEST

# ---- packed-slab layout ------------------------------------------------------
# W_wide (48, 256)  -- layer-1 weights (rows = input features, 8-aligned blocks)
#   rows  0:35, cols   0:128 : ws1.T   (fc_s1;  state  -> lanes   0:128)
#   rows 40:45, cols 192:256 : wa1.T   (fc_a1;  action -> lanes 192:256)
# W_sq (384, 128)   -- square layers (rows = contraction lanes)
#   rows   0:128, cols 0: 64 : ws2.T   (fc_s2, output lane-padded to 128)
#   rows 128:256, cols 0: 64 : w2.T    (fc2 on cat(s2, a))
#   rows 256:320, cols 0:  1 : w3.T    (fc3, lane-dense: real column 0)
# B slab (8, 256):
#   row 0 : [bs1 (128) | 0 (64) | ba1 (64)]    row 1 : bs2 (64)
#   row 2 : b2 (64)                            row 3 : b3 (lane 0)
WW_ROWS, WW_COLS = 48, LANES
WQ_ROWS, WQ_COLS = 384, WIDTH


def critic_kernel(s_ref, a_ref, ww_ref, wq_ref, b_ref, out_ref):
    # layer 1: fc_s1 / fc_a1 write disjoint lane ranges of one 256-wide act.
    y1 = (jnp.dot(s_ref[...], ww_ref[0:N_STATES, :],
                  preferred_element_type=jnp.float32, precision=_PREC)
          + jnp.dot(a_ref[...], ww_ref[40:40 + N_ACTIONS, :],
                    preferred_element_type=jnp.float32, precision=_PREC)
          + b_ref[0:1, :])
    y1 = jnp.maximum(y1, 0.0)            # (B, 256) = [ s (128) | 0 (64) | a (64) ]
    s = y1[:, 0:WIDTH]                   # (B, 128)  aligned vreg slice
    a_blk = y1[:, WIDTH:LANES]           # (B, 128) = [ 0 (64) | a (64) ]

    # s2 = relu(fc_s2(s)) into lanes 0:64, then splice `a` in with one vadd.
    z2 = jnp.maximum(
        jnp.dot(s, wq_ref[0:128, :], preferred_element_type=jnp.float32,
                precision=_PREC) + b_ref[1:2, 0:WIDTH],
        0.0) + a_blk                     # (B, 128) = [ s2 | a ]  == cat(s2, a)

    # x = relu(fc2(cat(s2, a)))  -- single matmul; lanes 64:128 of x are 0.
    x = jnp.maximum(
        jnp.dot(z2, wq_ref[128:256, :], preferred_element_type=jnp.float32,
                precision=_PREC) + b_ref[2:3, 0:WIDTH],
        0.0)                             # (B, 128)

    # out = fc3(x), lane-dense: real result lives in column 0 of (B, 128).
    out_ref[...] = (jnp.dot(x, wq_ref[256:384, :],
                            preferred_element_type=jnp.float32, precision=_PREC)
                    + b_ref[3:4, 0:WIDTH])


def prepare_params(params):
    """One-time parameter packing (hoisted out of the per-call hot path)."""
    (wa1, ba1, ws1, bs1, ws2, bs2, w2, b2, w3, b3) = params

    Ww = jnp.zeros((WW_ROWS, WW_COLS), jnp.float32)
    Ww = Ww.at[0:N_STATES, 0:WIDTH].set(ws1.T)                       # (35, 128)
    Ww = Ww.at[40:40 + N_ACTIONS, WIDTH + HALF:LANES].set(wa1.T)     # (5, 64)

    Wq = jnp.zeros((WQ_ROWS, WQ_COLS), jnp.float32)
    Wq = Wq.at[0:128, 0:HALF].set(ws2.T)                             # (128, 64)
    Wq = Wq.at[128:256, 0:HALF].set(w2.T)                            # (128, 64)
    Wq = Wq.at[256:320, 0:1].set(w3.T)                               # (64, 1) -> col 0

    Bv = jnp.zeros((8, LANES), jnp.float32)
    Bv = Bv.at[0, 0:WIDTH].set(bs1)
    Bv = Bv.at[0, WIDTH + HALF:LANES].set(ba1)
    Bv = Bv.at[1, 0:HALF].set(bs2)
    Bv = Bv.at[2, 0:HALF].set(b2)
    Bv = Bv.at[3, 0:1].set(b3)
    return Ww, Wq, Bv


def critic_forward(state, action, prepped):
    """state: (B, 5, 7) or (B, 35); action: (B, n_actions). Returns (B, 1)."""
    Ww, Wq, Bv = prepped
    B = state.shape[0]
    s_flat = state.reshape(B, -1).astype(jnp.float32)   # contiguous reshape (no copy)
    act = action.astype(jnp.float32)

    vmem = pl.BlockSpec(memory_space=pltpu.MemorySpace.VMEM)
    flops = 2 * B * (N_STATES * LANES + N_ACTIONS * LANES + 3 * WIDTH * WIDTH)
    bytes_accessed = 4 * (s_flat.size + act.size + Ww.size + Wq.size + Bv.size
                          + B * WIDTH)

    out = pl.pallas_call(
        critic_kernel,
        out_shape=jax.ShapeDtypeStruct((B, WIDTH), jnp.float32),
        in_specs=[vmem, vmem, vmem, vmem, vmem],
        out_specs=vmem,
        cost_estimate=pl.CostEstimate(flops=flops, transcendentals=0,
                                      bytes_accessed=bytes_accessed),
    )(s_flat, act, Ww, Wq, Bv)
    return out[:, :1]


def init_params(key):
    """Deterministic init matching the PyTorch layer shapes (out, in)."""
    def linear(key, out_f, in_f):
        k_w, k_b = jax.random.split(key)
        bound = 1.0 / jnp.sqrt(jnp.float32(in_f))
        w = jax.random.uniform(k_w, (out_f, in_f), jnp.float32, -bound, bound)
        b = jax.random.uniform(k_b, (out_f,), jnp.float32, -bound, bound)
        return w, b

    keys = jax.random.split(key, 5)
    wa1, ba1 = linear(keys[0], HALF, N_ACTIONS)      # fc_a1: (64, 5)
    ws1, bs1 = linear(keys[1], WIDTH, N_STATES)      # fc_s1: (128, 35)
    ws2, bs2 = linear(keys[2], HALF, WIDTH)          # fc_s2: (64, 128)
    w2, b2 = linear(keys[3], HALF, WIDTH)            # fc2  : (64, 128)
    w3, b3 = linear(keys[4], 1, HALF)                # fc3  : (1, 64)
    return (wa1, ba1, ws1, bs1, ws2, bs2, w2, b2, w3, b3)


def critic_reference(state, action, params):
    """Pure-JAX reference mirroring the PyTorch forward exactly."""
    (wa1, ba1, ws1, bs1, ws2, bs2, w2, b2, w3, b3) = params
    a = jax.nn.relu(action @ wa1.T + ba1)
    s = state.reshape(state.shape[0], -1)
    s = jax.nn.relu(s @ ws1.T + bs1)
    s = jax.nn.relu(s @ ws2.T + bs2)
    x = jnp.concatenate([s, a], axis=1)
    x = jax.nn.relu(x @ w2.T + b2)
    return x @ w3.T + b3


if __name__ == "__main__":
    key = jax.random.PRNGKey(0)
    k_p, k_s, k_a = jax.random.split(key, 3)

    params = init_params(k_p)
    prepped = jax.block_until_ready(prepare_params(params))   # one-time packing

    B = 8
    state = jax.random.normal(k_s, (B, 5, 7), jnp.float32)    # flattens to 35 features
    action = jax.random.normal(k_a, (B, N_ACTIONS), jnp.float32)

    fwd = jax.jit(critic_forward)
    out = jax.block_until_ready(fwd(state, action, prepped))

    ref = critic_reference(state, action, params)
    assert out.shape == (B, 1)
    assert jnp.allclose(out, ref, atol=1e-4, rtol=1e-4), (out, ref)

    print("KERNEL_OK")
</pallas_src>

<mosaic_0001>
module attributes {stable_mosaic.version = 11 : i64} {
  func.func @critic_kernel(%arg0: memref<8x35xf32, #tpu.memory_space<vmem>>, %arg1: memref<8x5xf32, #tpu.memory_space<vmem>>, %arg2: memref<48x256xf32, #tpu.memory_space<vmem>>, %arg3: memref<384x128xf32, #tpu.memory_space<vmem>>, %arg4: memref<8x256xf32, #tpu.memory_space<vmem>>, %arg5: memref<8x128xf32, #tpu.memory_space<vmem>>) attributes {dimension_semantics = [], scalar_prefetch = 0 : i64, scratch_operands = 0 : i64, tpu.core_type = #tpu.core_type<tc>} {
    %c0 = arith.constant 0 : index
    %c0_0 = arith.constant 0 : index
    %0 = vector.load %arg0[%c0, %c0_0] : memref<8x35xf32, #tpu.memory_space<vmem>>, vector<8x35xf32>
    %c0_1 = arith.constant 0 : index
    %c0_2 = arith.constant 0 : index
    %1 = vector.load %arg2[%c0_1, %c0_2] : memref<48x256xf32, #tpu.memory_space<vmem>>, vector<35x256xf32>
    %cst = arith.constant dense<0.000000e+00> : vector<8x256xf32>
    %2 = tpu.matmul %0, %1, %cst {dimension_numbers = #tpu.dot_dimension_numbers<[1], [0], [0], [1], [0, 0, 1, 1], [], []>, precision = #tpu.contract_precision<fp32>} : vector<8x35xf32>, vector<35x256xf32>, vector<8x256xf32> -> vector<8x256xf32>
    %c0_3 = arith.constant 0 : index
    %c0_4 = arith.constant 0 : index
    %3 = vector.load %arg1[%c0_3, %c0_4] : memref<8x5xf32, #tpu.memory_space<vmem>>, vector<8x5xf32>
    %c40 = arith.constant 40 : index
    %c0_5 = arith.constant 0 : index
    %4 = vector.load %arg2[%c40, %c0_5] : memref<48x256xf32, #tpu.memory_space<vmem>>, vector<5x256xf32>
    %cst_6 = arith.constant dense<0.000000e+00> : vector<8x256xf32>
    %5 = tpu.matmul %3, %4, %cst_6 {dimension_numbers = #tpu.dot_dimension_numbers<[1], [0], [0], [1], [0, 0, 1, 1], [], []>, precision = #tpu.contract_precision<fp32>} : vector<8x5xf32>, vector<5x256xf32>, vector<8x256xf32> -> vector<8x256xf32>
    %6 = arith.addf %2, %5 : vector<8x256xf32>
    %c0_7 = arith.constant 0 : index
    %c0_8 = arith.constant 0 : index
    %7 = vector.load %arg4[%c0_7, %c0_8] : memref<8x256xf32, #tpu.memory_space<vmem>>, vector<1x256xf32>
    %8 = vector.broadcast %7 : vector<1x256xf32> to vector<8x256xf32>
    %9 = arith.addf %6, %8 : vector<8x256xf32>
    %cst_9 = arith.constant 0.000000e+00 : f32
    %10 = vector.broadcast %cst_9 : f32 to vector<8x256xf32>
    %11 = arith.maximumf %9, %10 : vector<8x256xf32>
    %12 = vector.extract_strided_slice %11 {offsets = [0, 0], sizes = [8, 128], strides = [1, 1]} : vector<8x256xf32> to vector<8x128xf32>
    %13 = vector.extract_strided_slice %11 {offsets = [0, 128], sizes = [8, 128], strides = [1, 1]} : vector<8x256xf32> to vector<8x128xf32>
    %c0_10 = arith.constant 0 : index
    %c0_11 = arith.constant 0 : index
    %14 = vector.load %arg3[%c0_10, %c0_11] : memref<384x128xf32, #tpu.memory_space<vmem>>, vector<128x128xf32>
    %cst_12 = arith.constant dense<0.000000e+00> : vector<8x128xf32>
    %15 = tpu.matmul %12, %14, %cst_12 {dimension_numbers = #tpu.dot_dimension_numbers<[1], [0], [0], [1], [0, 0, 1, 1], [], []>, precision = #tpu.contract_precision<fp32>} : vector<8x128xf32>, vector<128x128xf32>, vector<8x128xf32> -> vector<8x128xf32>
    %c1 = arith.constant 1 : index
    %c0_13 = arith.constant 0 : index
    %16 = vector.load %arg4[%c1, %c0_13] : memref<8x256xf32, #tpu.memory_space<vmem>>, vector<1x128xf32>
    %17 = vector.broadcast %16 : vector<1x128xf32> to vector<8x128xf32>
    %18 = arith.addf %15, %17 : vector<8x128xf32>
    %cst_14 = arith.constant 0.000000e+00 : f32
    %19 = vector.broadcast %cst_14 : f32 to vector<8x128xf32>
    %20 = arith.maximumf %18, %19 : vector<8x128xf32>
    %21 = arith.addf %20, %13 : vector<8x128xf32>
    %c128 = arith.constant 128 : index
    %c0_15 = arith.constant 0 : index
    %22 = vector.load %arg3[%c128, %c0_15] : memref<384x128xf32, #tpu.memory_space<vmem>>, vector<128x128xf32>
    %cst_16 = arith.constant dense<0.000000e+00> : vector<8x128xf32>
    %23 = tpu.matmul %21, %22, %cst_16 {dimension_numbers = #tpu.dot_dimension_numbers<[1], [0], [0], [1], [0, 0, 1, 1], [], []>, precision = #tpu.contract_precision<fp32>} : vector<8x128xf32>, vector<128x128xf32>, vector<8x128xf32> -> vector<8x128xf32>
    %c2 = arith.constant 2 : index
    %c0_17 = arith.constant 0 : index
    %24 = vector.load %arg4[%c2, %c0_17] : memref<8x256xf32, #tpu.memory_space<vmem>>, vector<1x128xf32>
    %25 = vector.broadcast %24 : vector<1x128xf32> to vector<8x128xf32>
    %26 = arith.addf %23, %25 : vector<8x128xf32>
    %cst_18 = arith.constant 0.000000e+00 : f32
    %27 = vector.broadcast %cst_18 : f32 to vector<8x128xf32>
    %28 = arith.maximumf %26, %27 : vector<8x128xf32>
    %c256 = arith.constant 256 : index
    %c0_19 = arith.constant 0 : index
    %29 = vector.load %arg3[%c256, %c0_19] : memref<384x128xf32, #tpu.memory_space<vmem>>, vector<128x128xf32>
    %cst_20 = arith.constant dense<0.000000e+00> : vector<8x128xf32>
    %30 = tpu.matmul %28, %29, %cst_20 {dimension_numbers = #tpu.dot_dimension_numbers<[1], [0], [0], [1], [0, 0, 1, 1], [], []>, precision = #tpu.contract_precision<fp32>} : vector<8x128xf32>, vector<128x128xf32>, vector<8x128xf32> -> vector<8x128xf32>
    %c3 = arith.constant 3 : index
    %c0_21 = arith.constant 0 : index
    %31 = vector.load %arg4[%c3, %c0_21] : memref<8x256xf32, #tpu.memory_space<vmem>>, vector<1x128xf32>
    %32 = vector.broadcast %31 : vector<1x128xf32> to vector<8x128xf32>
    %33 = arith.addf %30, %32 : vector<8x128xf32>
    %c0_22 = arith.constant 0 : index
    %c0_23 = arith.constant 0 : index
    %34 = vector.load %arg5[%c0_22, %c0_23] : memref<8x128xf32, #tpu.memory_space<vmem>>, vector<8x128xf32>
    tpu.vector_store %arg5[%c0_22, %c0_23], %33 {strides = array<i32>} : memref<8x128xf32, #tpu.memory_space<vmem>>, vector<8x128xf32>,
    return
  }
}

</mosaic_0001>

<llo_original>
// kernel: critic_forward.1
$region0: #{critic_forward.1}
  #allocation0 [shape = 'u32[]', space=smem, size = 0x4, offset = 0x4, fixed_abs, tag = 'smem constant byte address 0x4 - core index']
  #allocation1 [shape = 'u32[144,128]{1,0:T(1,128)}', space=vmem, size = 0x12000, scoped, tag = 'internal scratch']
  %s0 = inlined_call_operand.vmem [shape: f32[8,35], index: 0, kind: input, shape index: {}]
  %s1 = inlined_call_operand.vmem [shape: f32[8,5], index: 1, kind: input, shape index: {}]
  %s2 = inlined_call_operand.vmem [shape: f32[48,256], index: 2, kind: input, shape index: {}]
  %s3 = inlined_call_operand.hbm [shape: f32[384,128], index: 3, kind: input, shape index: {}]
  %s4 = inlined_call_operand.vmem [shape: f32[8,256], index: 4, kind: input, shape index: {}]
  %s5 = inlined_call_operand.vmem [shape: f32[8,128], index: 5, kind: output, shape index: {}]
  %s6 = sld [smem:[#allocation0]]
  $region34: #{critic_forward.1} parent=0
    _
  %s8 = ssub.s32 1, %s6
  %s9 = scalar_select 0, %s8, %s6
  $region1: #{critic_forward.1} parent=0
    #allocation2 [shape = 'u8[196608]{0}', space=vmem, size = 0x30000, scoped, tag = 'input window, operand 3, single buffered']
    #allocation3 [shape = 's32[1]{0}', space=sflag, size = 0x4, scoped, tag = 'scoped memory for critic_forward.1']
    %10 = vsyncpa [#allocation3], 0
    // Predicated region
    $region2: #{critic_forward.1} parent=1 // pred_check
      _
    $region3: #{critic_forward.1} parent=1 // pred_check_branch
      %12 = sbr.rel (0) target = $region5
    $region4: #{critic_forward.1} parent=1 // pred_region
      _
    $region5: #{critic_forward.1} parent=1 // pred_fallthru
      _
    // Predicated region
    $region6: #{critic_forward.1} parent=1 // pred_check
      _
    $region7: #{critic_forward.1} parent=1 // pred_check_branch
      %14 = sbr.rel (0) target = $region9
    $region8: #{critic_forward.1} parent=1 // pred_region
      _
    $region9: #{critic_forward.1} parent=1 // pred_fallthru
      _
    // Predicated region
    $region10: #{critic_forward.1} parent=1 // pred_check
      _
    $region11: #{critic_forward.1} parent=1 // pred_check_branch
      %16 = sbr.rel (0) target = $region13
    $region12: #{critic_forward.1} parent=1 // pred_region
      _
    $region13: #{critic_forward.1} parent=1 // pred_fallthru
      _
    // Predicated region
    $region14: #{critic_forward.1} parent=1 // pred_check
      _
    $region15: #{critic_forward.1} parent=1 // pred_check_branch
      %18 = sbr.rel (0) target = $region17
    $region16: #{critic_forward.1} parent=1 // pred_region
      %s20 = ssub.s32 6144, 6144
      %21 = vsyncadd [#allocation3], %s20
      %s22 = sshll.u32 [#allocation2], 4
      %s23 = int_to_ptr.vmem [resolvable:$true] %s22
      %28 = dma.hbm_to_vmem [thread:$0]  %s3, 6144, %s23, [#allocation3], 128, 128, 8
    $region17: #{critic_forward.1} parent=1 // pred_fallthru
      _
    // Predicated region
    $region18: #{critic_forward.1} parent=1 // pred_check
      _
    $region19: #{critic_forward.1} parent=1 // pred_check_branch
      %30 = sbr.rel (0) target = $region21
    $region20: #{critic_forward.1} parent=1 // pred_region
      _
    $region21: #{critic_forward.1} parent=1 // pred_fallthru
      _
    // Predicated region
    $region22: #{critic_forward.1} parent=1 // pred_check
      _
    $region23: #{critic_forward.1} parent=1 // pred_check_branch
      %32 = sbr.rel (0) target = $region25
    $region24: #{critic_forward.1} parent=1 // pred_region
      %33 = dma.done [#allocation3], 6144
    $region25: #{critic_forward.1} parent=1 // pred_fallthru
      _
    %v34 = vld [vmem:[%s0] sm:$0xff]
    %v35 = vld [vmem:[%s2] sm:$0xff]
    %v36 = vld [vmem:[%s2 + $0x8] sm:$0xff]
    %v37 = vld [vmem:[%s2 + $0x10] sm:$0xff]
    %v38 = vld [vmem:[%s2 + $0x18] sm:$0xff]
    %v39 = vld [vmem:[%s2 + $0x20] sm:$0xff]
    %v40 = vld [vmem:[%s2 + $0x28] sm:$0xff]
    %v41 = vld [vmem:[%s2 + $0x30] sm:$0xff]
    %v42 = vld [vmem:[%s2 + $0x38] sm:$0xff]
    %v43 = vld [vmem:[%s2 + $0x40] sm:$0x7]
    %v44 = vld [vmem:[%s2 + $0x48] sm:$0x7]
    %v45 = vld [vmem:[%s1] sm:$0xff]
    %v46 = vld [vmem:[%s2 + $0x50] sm:$0x1f]
    %v47 = vld [vmem:[%s2 + $0x58] sm:$0x1f]
    %vm48 = vcmask 39936
    %v50 = vsel %vm48, %v45, 0
    %vm52 = vcmask 1044480
    %v54 = vsel %vm52, %v46, 0
    %v57 = vsel %vm52, %v47, 0
    %59 = vmatprep.subr.mxu0 0.0
    %60 = vmatpush1.msra.mxu0 0.0
    %61 = vmatprep.subr.mxu0 0.0
    %62 = vmatpush1.msra.mxu0 0.0
    %63 = vmatprep.subr.mxu0 0.0
    %64 = vmatpush1.msra.mxu0 0.0
    %65 = vmatprep.subr.mxu0 0.0
    %66 = vmatpush1.msra.mxu0 0.0
    %67 = vmatprep.subr.mxu0 0.0
    %68 = vmatpush1.msra.mxu0 0.0
    %69 = vmatprep.subr.mxu0 0.0
    %70 = vmatpush1.msra.mxu0 0.0
    %71 = vmatprep.subr.mxu0 0.0
    %72 = vmatpush1.msra.mxu0 0.0
    %73 = vmatprep.subr.mxu0 0.0
    %74 = vmatpush1.msra.mxu0 0.0
    %75 = vmatprep.subr.mxu0 0.0
    %76 = vmatpush1.msra.mxu0 0.0
    %77 = vmatprep.subr.mxu0 0.0
    %78 = vmatpush1.msra.mxu0 0.0
    %79 = vmatprep.subr.mxu0 0.0
    %80 = vmatpush1.msra.mxu0 0.0
    %81 = vmatprep.subr.mxu0 0.0
    %82 = vmatpush1.msra.mxu0 0.0
    %83 = vmatprep.subr.mxu0 0.0
    %84 = vmatpush1.msra.mxu0 0.0
    %85 = vmatprep.subr.mxu0 0.0
    %86 = vmatpush1.msra.mxu0 0.0
    %87 = vmatprep.subr.mxu0 0.0
    %88 = vmatpush1.msra.mxu0 0.0
    %v89 = vand.u32 %v57, 4294901760
    %90 = vmatprep.subr.mxu0 %v89
    %v91 = vand.u32 %v54, 4294901760
    %92 = vmatpush1.msra.mxu0 %v91
    %93 = vmatprep.subr.mxu0 0.0
    %94 = vmatpush2.msra.mxu0 0.0
    %95 = vmatprep.subr.mxu0 0.0
    %96 = vmatpush2.msra.mxu0 0.0
    %97 = vmatprep.subr.mxu0 0.0
    %98 = vmatpush2.msra.mxu0 0.0
    %99 = vmatprep.subr.mxu0 0.0
    %100 = vmatpush2.msra.mxu0 0.0
    %101 = vmatprep.subr.mxu0 0.0
    %102 = vmatpush2.msra.mxu0 0.0
    %103 = vmatprep.subr.mxu0 0.0
    %104 = vmatpush2.msra.mxu0 0.0
    %105 = vmatprep.subr.mxu0 0.0
    %106 = vmatpush2.msra.mxu0 0.0
    %107 = vmatprep.subr.mxu0 0.0
    %108 = vmatpush2.msra.mxu0 0.0
    %109 = vmatprep.subr.mxu0 0.0
    %110 = vmatpush2.msra.mxu0 0.0
    %111 = vmatprep.subr.mxu0 0.0
    %112 = vmatpush2.msra.mxu0 0.0
    %113 = vmatprep.subr.mxu0 0.0
    %114 = vmatpush2.msra.mxu0 0.0
    %115 = vmatprep.subr.mxu0 0.0
    %116 = vmatpush2.msra.mxu0 0.0
    %117 = vmatprep.subr.mxu0 0.0
    %118 = vmatpush2.msra.mxu0 0.0
    %119 = vmatprep.subr.mxu0 0.0
    %120 = vmatpush2.msra.mxu0 0.0
    %121 = vmatprep.subr.mxu0 0.0
    %122 = vmatpush2.msra.mxu0 0.0
    %123 = vmatprep.subr.mxu0 0.0
    %124 = vmatpush2.msra.mxu0 0.0
    %125 = vmatprep.mubr.f32.mxu0 0.0
    %v126 = vand.u32 %v50, 4294901760
    %v127 = vsub.f32 %v50, %v126
    %v128 = vand.u32 %v127, 4294901760
    %v129 = vsub.f32 %v127, %v128
    %v130 = vand.u32 %v129, 4294901760
    %131 = vmatmul.mubr.f32.gmra.mxu0 %v130
    %v132 = vpop.f32.mrf.mxu0
    %v133 = vadd.f32 0.0, %v132
    %v134 = vpop.f32.mrf.mxu0
    %v135 = vadd.f32 0.0, %v134
    %136 = vdwg.mxu0
    %137 = vmatprep.subr.mxu0 0.0
    %138 = vmatpush1.msra.mxu0 0.0
    %139 = vmatprep.subr.mxu0 0.0
    %140 = vmatpush1.msra.mxu0 0.0
    %141 = vmatprep.subr.mxu0 0.0
    %142 = vmatpush1.msra.mxu0 0.0
    %143 = vmatprep.subr.mxu0 0.0
    %144 = vmatpush1.msra.mxu0 0.0
    %145 = vmatprep.subr.mxu0 0.0
    %146 = vmatpush1.msra.mxu0 0.0
    %147 = vmatprep.subr.mxu0 0.0
    %148 = vmatpush1.msra.mxu0 0.0
    %149 = vmatprep.subr.mxu0 0.0
    %150 = vmatpush1.msra.mxu0 0.0
    %151 = vmatprep.subr.mxu0 0.0
    %152 = vmatpush1.msra.mxu0 0.0
    %153 = vmatprep.subr.mxu0 0.0
    %154 = vmatpush1.msra.mxu0 0.0
    %155 = vmatprep.subr.mxu0 0.0
    %156 = vmatpush1.msra.mxu0 0.0
    %157 = vmatprep.subr.mxu0 0.0
    %158 = vmatpush1.msra.mxu0 0.0
    %159 = vmatprep.subr.mxu0 0.0
    %160 = vmatpush1.msra.mxu0 0.0
    %161 = vmatprep.subr.mxu0 0.0
    %162 = vmatpush1.msra.mxu0 0.0
    %163 = vmatprep.subr.mxu0 0.0
    %164 = vmatpush1.msra.mxu0 0.0
    %165 = vmatprep.subr.mxu0 0.0
    %166 = vmatpush1.msra.mxu0 0.0
    %v167 = vand.u32 %v57, 4294901760
    %v168 = vsub.f32 %v57, %v167
    %v169 = vand.u32 %v168, 4294901760
    %v170 = vsub.f32 %v168, %v169
    %v171 = vand.u32 %v170, 4294901760
    %172 = vmatprep.subr.mxu0 %v171
    %v173 = vand.u32 %v54, 4294901760
    %v174 = vsub.f32 %v54, %v173
    %v175 = vand.u32 %v174, 4294901760
    %v176 = vsub.f32 %v174, %v175
    %v177 = vand.u32 %v176, 4294901760
    %178 = vmatpush1.msra.mxu0 %v177
    %179 = vmatprep.subr.mxu0 0.0
    %180 = vmatpush2.msra.mxu0 0.0
    %181 = vmatprep.subr.mxu0 0.0
    %182 = vmatpush2.msra.mxu0 0.0
    %183 = vmatprep.subr.mxu0 0.0
    %184 = vmatpush2.msra.mxu0 0.0
    %185 = vmatprep.subr.mxu0 0.0
    %186 = vmatpush2.msra.mxu0 0.0
    %187 = vmatprep.subr.mxu0 0.0
    %188 = vmatpush2.msra.mxu0 0.0
    %189 = vmatprep.subr.mxu0 0.0
    %190 = vmatpush2.msra.mxu0 0.0
    %191 = vmatprep.subr.mxu0 0.0
    %192 = vmatpush2.msra.mxu0 0.0
    %193 = vmatprep.subr.mxu0 0.0
    %194 = vmatpush2.msra.mxu0 0.0
    %195 = vmatprep.subr.mxu0 0.0
    %196 = vmatpush2.msra.mxu0 0.0
    %197 = vmatprep.subr.mxu0 0.0
    %198 = vmatpush2.msra.mxu0 0.0
    %199 = vmatprep.subr.mxu0 0.0
    %200 = vmatpush2.msra.mxu0 0.0
    %201 = vmatprep.subr.mxu0 0.0
    %202 = vmatpush2.msra.mxu0 0.0
    %203 = vmatprep.subr.mxu0 0.0
    %204 = vmatpush2.msra.mxu0 0.0
    %205 = vmatprep.subr.mxu0 0.0
    %206 = vmatpush2.msra.mxu0 0.0
    %207 = vmatprep.subr.mxu0 0.0
    %208 = vmatpush2.msra.mxu0 0.0
    %209 = vmatprep.subr.mxu0 0.0
    %210 = vmatpush2.msra.mxu0 0.0
    %211 = vmatprep.mubr.f32.mxu0 0.0
    %v212 = vand.u32 %v50, 4294901760
    %213 = vmatmul.mubr.f32.gmra.mxu0 %v212
    %v214 = vpop.f32.mrf.mxu0
    %v215 = vadd.f32 %v133, %v214
    %v216 = vpop.f32.mrf.mxu0
    %v217 = vadd.f32 %v135, %v216
    %218 = vdwg.mxu0
    %219 = vmatprep.subr.mxu0 0.0
    %220 = vmatpush1.msra.mxu0 0.0
    %221 = vmatprep.subr.mxu0 0.0
    %222 = vmatpush1.msra.mxu0 0.0
    %223 = vmatprep.subr.mxu0 0.0
    %224 = vmatpush1.msra.mxu0 0.0
    %225 = vmatprep.subr.mxu0 0.0
    %226 = vmatpush1.msra.mxu0 0.0
    %227 = vmatprep.subr.mxu0 0.0
    %228 = vmatpush1.msra.mxu0 0.0
    %229 = vmatprep.subr.mxu0 0.0
    %230 = vmatpush1.msra.mxu0 0.0
    %231 = vmatprep.subr.mxu0 0.0
    %232 = vmatpush1.msra.mxu0 0.0
    %233 = vmatprep.subr.mxu0 0.0
    %234 = vmatpush1.msra.mxu0 0.0
    %235 = vmatprep.subr.mxu0 0.0
    %236 = vmatpush1.msra.mxu0 0.0
    %237 = vmatprep.subr.mxu0 0.0
    %238 = vmatpush1.msra.mxu0 0.0
    %239 = vmatprep.subr.mxu0 0.0
    %240 = vmatpush1.msra.mxu0 0.0
    %241 = vmatprep.subr.mxu0 0.0
    %242 = vmatpush1.msra.mxu0 0.0
    %243 = vmatprep.subr.mxu0 0.0
    %244 = vmatpush1.msra.mxu0 0.0
    %245 = vmatprep.subr.mxu0 0.0
    %246 = vmatpush1.msra.mxu0 0.0
    %247 = vmatprep.subr.mxu0 0.0
    %248 = vmatpush1.msra.mxu0 0.0
    %v249 = vand.u32 %v57, 4294901760
    %v250 = vsub.f32 %v57, %v249
    %251 = vmatprep.subr.mxu0 %v250
    %v252 = vand.u32 %v54, 4294901760
    %v253 = vsub.f32 %v54, %v252
    %254 = vmatpush1.msra.mxu0 %v253
    %255 = vmatprep.subr.mxu0 0.0
    %256 = vmatpush2.msra.mxu0 0.0
    %257 = vmatprep.subr.mxu0 0.0
    %258 = vmatpush2.msra.mxu0 0.0
    %259 = vmatprep.subr.mxu0 0.0
    %260 = vmatpush2.msra.mxu0 0.0
    %261 = vmatprep.subr.mxu0 0.0
    %262 = vmatpush2.msra.mxu0 0.0
    %263 = vmatprep.subr.mxu0 0.0
    %264 = vmatpush2.msra.mxu0 0.0
    %265 = vmatprep.subr.mxu0 0.0
    %266 = vmatpush2.msra.mxu0 0.0
    %267 = vmatprep.subr.mxu0 0.0
    %268 = vmatpush2.msra.mxu0 0.0
    %269 = vmatprep.subr.mxu0 0.0
    %270 = vmatpush2.msra.mxu0 0.0
    %271 = vmatprep.subr.mxu0 0.0
    %272 = vmatpush2.msra.mxu0 0.0
    %273 = vmatprep.subr.mxu0 0.0
    %274 = vmatpush2.msra.mxu0 0.0
    %275 = vmatprep.subr.mxu0 0.0
    %276 = vmatpush2.msra.mxu0 0.0
    %277 = vmatprep.subr.mxu0 0.0
    %278 = vmatpush2.msra.mxu0 0.0
    %279 = vmatprep.subr.mxu0 0.0
    %280 = vmatpush2.msra.mxu0 0.0
    %281 = vmatprep.subr.mxu0 0.0
    %282 = vmatpush2.msra.mxu0 0.0
    %283 = vmatprep.subr.mxu0 0.0
    %284 = vmatpush2.msra.mxu0 0.0
    %285 = vmatprep.subr.mxu0 0.0
    %286 = vmatpush2.msra.mxu0 0.0
    %287 = vmatprep.mubr.f32.mxu0 0.0
    %v288 = vand.u32 %v50, 4294901760
    %v289 = vsub.f32 %v50, %v288
    %290 = vmatmul.mubr.f32.gmra.mxu0 %v289
    %v291 = vpop.f32.mrf.mxu0
    %v292 = vadd.f32 %v215, %v291
    %v293 = vpop.f32.mrf.mxu0
    %v294 = vadd.f32 %v217, %v293
    %295 = vdwg.mxu0
    %296 = vmatprep.subr.mxu0 0.0
    %297 = vmatpush1.msra.mxu0 0.0
    %298 = vmatprep.subr.mxu0 0.0
    %299 = vmatpush1.msra.mxu0 0.0
    %300 = vmatprep.subr.mxu0 0.0
    %301 = vmatpush1.msra.mxu0 0.0
    %302 = vmatprep.subr.mxu0 0.0
    %303 = vmatpush1.msra.mxu0 0.0
    %304 = vmatprep.subr.mxu0 0.0
    %305 = vmatpush1.msra.mxu0 0.0
    %306 = vmatprep.subr.mxu0 0.0
    %307 = vmatpush1.msra.mxu0 0.0
    %308 = vmatprep.subr.mxu0 0.0
    %309 = vmatpush1.msra.mxu0 0.0
    %310 = vmatprep.subr.mxu0 0.0
    %311 = vmatpush1.msra.mxu0 0.0
    %312 = vmatprep.subr.mxu0 0.0
    %313 = vmatpush1.msra.mxu0 0.0
    %314 = vmatprep.subr.mxu0 0.0
    %315 = vmatpush1.msra.mxu0 0.0
    %316 = vmatprep.subr.mxu0 0.0
    %317 = vmatpush1.msra.mxu0 0.0
    %318 = vmatprep.subr.mxu0 0.0
    %319 = vmatpush1.msra.mxu0 0.0
    %320 = vmatprep.subr.mxu0 0.0
    %321 = vmatpush1.msra.mxu0 0.0
    %322 = vmatprep.subr.mxu0 0.0
    %323 = vmatpush1.msra.mxu0 0.0
    %324 = vmatprep.subr.mxu0 0.0
    %325 = vmatpush1.msra.mxu0 0.0
    %v326 = vand.u32 %v57, 4294901760
    %327 = vmatprep.subr.mxu0 %v326
    %v328 = vand.u32 %v54, 4294901760
    %329 = vmatpush1.msra.mxu0 %v328
    %330 = vmatprep.subr.mxu0 0.0
    %331 = vmatpush2.msra.mxu0 0.0
    %332 = vmatprep.subr.mxu0 0.0
    %333 = vmatpush2.msra.mxu0 0.0
    %334 = vmatprep.subr.mxu0 0.0
    %335 = vmatpush2.msra.mxu0 0.0
    %336 = vmatprep.subr.mxu0 0.0
    %337 = vmatpush2.msra.mxu0 0.0
    %338 = vmatprep.subr.mxu0 0.0
    %339 = vmatpush2.msra.mxu0 0.0
    %340 = vmatprep.subr.mxu0 0.0
    %341 = vmatpush2.msra.mxu0 0.0
    %342 = vmatprep.subr.mxu0 0.0
    %343 = vmatpush2.msra.mxu0 0.0
    %344 = vmatprep.subr.mxu0 0.0
    %345 = vmatpush2.msra.mxu0 0.0
    %346 = vmatprep.subr.mxu0 0.0
    %347 = vmatpush2.msra.mxu0 0.0
    %348 = vmatprep.subr.mxu0 0.0
    %349 = vmatpush2.msra.mxu0 0.0
    %350 = vmatprep.subr.mxu0 0.0
    %351 = vmatpush2.msra.mxu0 0.0
    %352 = vmatprep.subr.mxu0 0.0
    %353 = vmatpush2.msra.mxu0 0.0
    %354 = vmatprep.subr.mxu0 0.0
    %355 = vmatpush2.msra.mxu0 0.0
    %356 = vmatprep.subr.mxu0 0.0
    %357 = vmatpush2.msra.mxu0 0.0
    %358 = vmatprep.subr.mxu0 0.0
    %359 = vmatpush2.msra.mxu0 0.0
    %360 = vmatprep.subr.mxu0 0.0
    %361 = vmatpush2.msra.mxu0 0.0
    %362 = vmatprep.mubr.f32.mxu0 0.0
    %v363 = vand.u32 %v50, 4294901760
    %v364 = vsub.f32 %v50, %v363
    %v365 = vand.u32 %v364, 4294901760
    %366 = vmatmul.mubr.f32.gmra.mxu0 %v365
    %v367 = vpop.f32.mrf.mxu0
    %v368 = vadd.f32 %v292, %v367
    %v369 = vpop.f32.mrf.mxu0
    %v370 = vadd.f32 %v294, %v369
    %371 = vdwg.mxu0
    %372 = vmatprep.subr.mxu0 0.0
    %373 = vmatpush1.msra.mxu0 0.0
    %374 = vmatprep.subr.mxu0 0.0
    %375 = vmatpush1.msra.mxu0 0.0
    %376 = vmatprep.subr.mxu0 0.0
    %377 = vmatpush1.msra.mxu0 0.0
    %378 = vmatprep.subr.mxu0 0.0
    %379 = vmatpush1.msra.mxu0 0.0
    %380 = vmatprep.subr.mxu0 0.0
    %381 = vmatpush1.msra.mxu0 0.0
    %382 = vmatprep.subr.mxu0 0.0
    %383 = vmatpush1.msra.mxu0 0.0
    %384 = vmatprep.subr.mxu0 0.0
    %385 = vmatpush1.msra.mxu0 0.0
    %386 = vmatprep.subr.mxu0 0.0
    %387 = vmatpush1.msra.mxu0 0.0
    %388 = vmatprep.subr.mxu0 0.0
    %389 = vmatpush1.msra.mxu0 0.0
    %390 = vmatprep.subr.mxu0 0.0
    %391 = vmatpush1.msra.mxu0 0.0
    %392 = vmatprep.subr.mxu0 0.0
    %393 = vmatpush1.msra.mxu0 0.0
    %394 = vmatprep.subr.mxu0 0.0
    %395 = vmatpush1.msra.mxu0 0.0
    %396 = vmatprep.subr.mxu0 0.0
    %397 = vmatpush1.msra.mxu0 0.0
    %398 = vmatprep.subr.mxu0 0.0
    %399 = vmatpush1.msra.mxu0 0.0
    %400 = vmatprep.subr.mxu0 0.0
    %401 = vmatpush1.msra.mxu0 0.0
    %v402 = vand.u32 %v57, 4294901760
    %v403 = vsub.f32 %v57, %v402
    %v404 = vand.u32 %v403, 4294901760
    %405 = vmatprep.subr.mxu0 %v404
    %v406 = vand.u32 %v54, 4294901760
    %v407 = vsub.f32 %v54, %v406
    %v408 = vand.u32 %v407, 4294901760
    %409 = vmatpush1.msra.mxu0 %v408
    %410 = vmatprep.subr.mxu0 0.0
    %411 = vmatpush2.msra.mxu0 0.0
    %412 = vmatprep.subr.mxu0 0.0
    %413 = vmatpush2.msra.mxu0 0.0
    %414 = vmatprep.subr.mxu0 0.0
    %415 = vmatpush2.msra.mxu0 0.0
    %416 = vmatprep.subr.mxu0 0.0
    %417 = vmatpush2.msra.mxu0 0.0
    %418 = vmatprep.subr.mxu0 0.0
    %419 = vmatpush2.msra.mxu0 0.0
    %420 = vmatprep.subr.mxu0 0.0
    %421 = vmatpush2.msra.mxu0 0.0
    %422 = vmatprep.subr.mxu0 0.0
    %423 = vmatpush2.msra.mxu0 0.0
    %424 = vmatprep.subr.mxu0 0.0
    %425 = vmatpush2.msra.mxu0 0.0
    %426 = vmatprep.subr.mxu0 0.0
    %427 = vmatpush2.msra.mxu0 0.0
    %428 = vmatprep.subr.mxu0 0.0
    %429 = vmatpush2.msra.mxu0 0.0
    %430 = vmatprep.subr.mxu0 0.0
    %431 = vmatpush2.msra.mxu0 0.0
    %432 = vmatprep.subr.mxu0 0.0
    %433 = vmatpush2.msra.mxu0 0.0
    %434 = vmatprep.subr.mxu0 0.0
    %435 = vmatpush2.msra.mxu0 0.0
    %436 = vmatprep.subr.mxu0 0.0
    %437 = vmatpush2.msra.mxu0 0.0
    %438 = vmatprep.subr.mxu0 0.0
    %439 = vmatpush2.msra.mxu0 0.0
    %440 = vmatprep.subr.mxu0 0.0
    %441 = vmatpush2.msra.mxu0 0.0
    %442 = vmatprep.mubr.f32.mxu0 0.0
    %v443 = vand.u32 %v50, 4294901760
    %444 = vmatmul.mubr.f32.gmra.mxu0 %v443
    %v445 = vpop.f32.mrf.mxu0
    %v446 = vadd.f32 %v368, %v445
    %v447 = vpop.f32.mrf.mxu0
    %v448 = vadd.f32 %v370, %v447
    %449 = vdwg.mxu0
    %450 = vmatprep.subr.mxu0 0.0
    %451 = vmatpush1.msra.mxu0 0.0
    %452 = vmatprep.subr.mxu0 0.0
    %453 = vmatpush1.msra.mxu0 0.0
    %454 = vmatprep.subr.mxu0 0.0
    %455 = vmatpush1.msra.mxu0 0.0
    %456 = vmatprep.subr.mxu0 0.0
    %457 = vmatpush1.msra.mxu0 0.0
    %458 = vmatprep.subr.mxu0 0.0
    %459 = vmatpush1.msra.mxu0 0.0
    %460 = vmatprep.subr.mxu0 0.0
    %461 = vmatpush1.msra.mxu0 0.0
    %462 = vmatprep.subr.mxu0 0.0
    %463 = vmatpush1.msra.mxu0 0.0
    %464 = vmatprep.subr.mxu0 0.0
    %465 = vmatpush1.msra.mxu0 0.0
    %466 = vmatprep.subr.mxu0 0.0
    %467 = vmatpush1.msra.mxu0 0.0
    %468 = vmatprep.subr.mxu0 0.0
    %469 = vmatpush1.msra.mxu0 0.0
    %470 = vmatprep.subr.mxu0 0.0
    %471 = vmatpush1.msra.mxu0 0.0
    %472 = vmatprep.subr.mxu0 0.0
    %473 = vmatpush1.msra.mxu0 0.0
    %474 = vmatprep.subr.mxu0 0.0
    %475 = vmatpush1.msra.mxu0 0.0
    %476 = vmatprep.subr.mxu0 0.0
    %477 = vmatpush1.msra.mxu0 0.0
    %478 = vmatprep.subr.mxu0 0.0
    %479 = vmatpush1.msra.mxu0 0.0
    %v480 = vand.u32 %v57, 4294901760
    %481 = vmatprep.subr.mxu0 %v480
    %v482 = vand.u32 %v54, 4294901760
    %483 = vmatpush1.msra.mxu0 %v482
    %484 = vmatprep.subr.mxu0 0.0
    %485 = vmatpush2.msra.mxu0 0.0
    %486 = vmatprep.subr.mxu0 0.0
    %487 = vmatpush2.msra.mxu0 0.0
    %488 = vmatprep.subr.mxu0 0.0
    %489 = vmatpush2.msra.mxu0 0.0
    %490 = vmatprep.subr.mxu0 0.0
    %491 = vmatpush2.msra.mxu0 0.0
    %492 = vmatprep.subr.mxu0 0.0
    %493 = vmatpush2.msra.mxu0 0.0
    %494 = vmatprep.subr.mxu0 0.0
    %495 = vmatpush2.msra.mxu0 0.0
    %496 = vmatprep.subr.mxu0 0.0
    %497 = vmatpush2.msra.mxu0 0.0
    %498 = vmatprep.subr.mxu0 0.0
    %499 = vmatpush2.msra.mxu0 0.0
    %500 = vmatprep.subr.mxu0 0.0
    %501 = vmatpush2.msra.mxu0 0.0
    %502 = vmatprep.subr.mxu0 0.0
    %503 = vmatpush2.msra.mxu0 0.0
    %504 = vmatprep.subr.mxu0 0.0
    %505 = vmatpush2.msra.mxu0 0.0
    %506 = vmatprep.subr.mxu0 0.0
    %507 = vmatpush2.msra.mxu0 0.0
    %508 = vmatprep.subr.mxu0 0.0
    %509 = vmatpush2.msra.mxu0 0.0
    %510 = vmatprep.subr.mxu0 0.0
    %511 = vmatpush2.msra.mxu0 0.0
    %512 = vmatprep.subr.mxu0 0.0
    %513 = vmatpush2.msra.mxu0 0.0
    %514 = vmatprep.subr.mxu0 0.0
    %515 = vmatpush2.msra.mxu0 0.0
    %516 = vmatprep.mubr.f32.mxu0 0.0
    %v517 = vand.u32 %v50, 4294901760
    %518 = vmatmul.mubr.f32.gmra.mxu0 %v517
    %v519 = vpop.f32.mrf.mxu0
    %v520 = vadd.f32 %v446, %v519
    %v521 = vpop.f32.mrf.mxu0
    %v522 = vadd.f32 %v448, %v521
    %523 = vdwg.mxu0
    %vm524 = vcmask 285696
    %v526 = vsel %vm524, %v34, 0
    %vm528 = vcmask 1042432
    %v530 = vsel %vm528, %v43, 0
    %v533 = vsel %vm528, %v44, 0
    %535 = vmatprep.subr.mxu0 0.0
    %536 = vmatpush1.msra.mxu0 0.0
    %537 = vmatprep.subr.mxu0 0.0
    %538 = vmatpush1.msra.mxu0 0.0
    %539 = vmatprep.subr.mxu0 0.0
    %540 = vmatpush1.msra.mxu0 0.0
    %541 = vmatprep.subr.mxu0 0.0
    %542 = vmatpush1.msra.mxu0 0.0
    %543 = vmatprep.subr.mxu0 0.0
    %544 = vmatpush1.msra.mxu0 0.0
    %545 = vmatprep.subr.mxu0 0.0
    %546 = vmatpush1.msra.mxu0 0.0
    %547 = vmatprep.subr.mxu0 0.0
    %548 = vmatpush1.msra.mxu0 0.0
    %549 = vmatprep.subr.mxu0 0.0
    %550 = vmatpush1.msra.mxu0 0.0
    %551 = vmatprep.subr.mxu0 0.0
    %552 = vmatpush1.msra.mxu0 0.0
    %553 = vmatprep.subr.mxu0 0.0
    %554 = vmatpush1.msra.mxu0 0.0
    %555 = vmatprep.subr.mxu0 0.0
    %556 = vmatpush1.msra.mxu0 0.0
    %v557 = vand.u32 %v533, 4294901760
    %558 = vmatprep.subr.mxu0 %v557
    %v559 = vand.u32 %v530, 4294901760
    %560 = vmatpush1.msra.mxu0 %v559
    %v561 = vand.u32 %v42, 4294901760
    %562 = vmatprep.subr.mxu0 %v561
    %v563 = vand.u32 %v41, 4294901760
    %564 = vmatpush1.msra.mxu0 %v563
    %v565 = vand.u32 %v40, 4294901760
    %566 = vmatprep.subr.mxu0 %v565
    %v567 = vand.u32 %v39, 4294901760
    %568 = vmatpush1.msra.mxu0 %v567
    %v569 = vand.u32 %v38, 4294901760
    %570 = vmatprep.subr.mxu0 %v569
    %v571 = vand.u32 %v37, 4294901760
    %572 = vmatpush1.msra.mxu0 %v571
    %v573 = vand.u32 %v36, 4294901760
    %574 = vmatprep.subr.mxu0 %v573
    %v575 = vand.u32 %v35, 4294901760
    %576 = vmatpush1.msra.mxu0 %v575
    %577 = vmatprep.subr.mxu0 0.0
    %578 = vmatpush2.msra.mxu0 0.0
    %579 = vmatprep.subr.mxu0 0.0
    %580 = vmatpush2.msra.mxu0 0.0
    %581 = vmatprep.subr.mxu0 0.0
    %582 = vmatpush2.msra.mxu0 0.0
    %583 = vmatprep.subr.mxu0 0.0
    %584 = vmatpush2.msra.mxu0 0.0
    %585 = vmatprep.subr.mxu0 0.0
    %586 = vmatpush2.msra.mxu0 0.0
    %587 = vmatprep.subr.mxu0 0.0
    %588 = vmatpush2.msra.mxu0 0.0
    %589 = vmatprep.subr.mxu0 0.0
    %590 = vmatpush2.msra.mxu0 0.0
    %591 = vmatprep.subr.mxu0 0.0
    %592 = vmatpush2.msra.mxu0 0.0
    %593 = vmatprep.subr.mxu0 0.0
    %594 = vmatpush2.msra.mxu0 0.0
    %595 = vmatprep.subr.mxu0 0.0
    %596 = vmatpush2.msra.mxu0 0.0
    %597 = vmatprep.subr.mxu0 0.0
    %598 = vmatpush2.msra.mxu0 0.0
    %599 = vmatprep.subr.mxu0 0.0
    %600 = vmatpush2.msra.mxu0 0.0
    %601 = vmatprep.subr.mxu0 0.0
    %602 = vmatpush2.msra.mxu0 0.0
    %603 = vmatprep.subr.mxu0 0.0
    %604 = vmatpush2.msra.mxu0 0.0
    %605 = vmatprep.subr.mxu0 0.0
    %606 = vmatpush2.msra.mxu0 0.0
    %607 = vmatprep.subr.mxu0 0.0
    %608 = vmatpush2.msra.mxu0 0.0
    %609 = vmatprep.mubr.f32.mxu0 0.0
    %v610 = vand.u32 %v526, 4294901760
    %v611 = vsub.f32 %v526, %v610
    %v612 = vand.u32 %v611, 4294901760
    %v613 = vsub.f32 %v611, %v612
    %v614 = vand.u32 %v613, 4294901760
    %615 = vmatmul.mubr.f32.gmra.mxu0 %v614
    %v616 = vpop.f32.mrf.mxu0
    %v617 = vadd.f32 %v520, %v616
    %v618 = vpop.f32.mrf.mxu0
    %v619 = vadd.f32 %v522, %v618
    %620 = vdwg.mxu0
    %621 = vmatprep.subr.mxu0 0.0
    %622 = vmatpush1.msra.mxu0 0.0
    %623 = vmatprep.subr.mxu0 0.0
    %624 = vmatpush1.msra.mxu0 0.0
    %625 = vmatprep.subr.mxu0 0.0
    %626 = vmatpush1.msra.mxu0 0.0
    %627 = vmatprep.subr.mxu0 0.0
    %628 = vmatpush1.msra.mxu0 0.0
    %629 = vmatprep.subr.mxu0 0.0
    %630 = vmatpush1.msra.mxu0 0.0
    %631 = vmatprep.subr.mxu0 0.0
    %632 = vmatpush1.msra.mxu0 0.0
    %633 = vmatprep.subr.mxu0 0.0
    %634 = vmatpush1.msra.mxu0 0.0
    %635 = vmatprep.subr.mxu0 0.0
    %636 = vmatpush1.msra.mxu0 0.0
    %637 = vmatprep.subr.mxu0 0.0
    %638 = vmatpush1.msra.mxu0 0.0
    %639 = vmatprep.subr.mxu0 0.0
    %640 = vmatpush1.msra.mxu0 0.0
    %641 = vmatprep.subr.mxu0 0.0
    %642 = vmatpush1.msra.mxu0 0.0
    %v643 = vand.u32 %v533, 4294901760
    %v644 = vsub.f32 %v533, %v643
    %v645 = vand.u32 %v644, 4294901760
    %v646 = vsub.f32 %v644, %v645
    %v647 = vand.u32 %v646, 4294901760
    %648 = vmatprep.subr.mxu0 %v647
    %v649 = vand.u32 %v530, 4294901760
    %v650 = vsub.f32 %v530, %v649
    %v651 = vand.u32 %v650, 4294901760
    %v652 = vsub.f32 %v650, %v651
    %v653 = vand.u32 %v652, 4294901760
    %654 = vmatpush1.msra.mxu0 %v653
    %v655 = vand.u32 %v42, 4294901760
    %v656 = vsub.f32 %v42, %v655
    %v657 = vand.u32 %v656, 4294901760
    %v658 = vsub.f32 %v656, %v657
    %v659 = vand.u32 %v658, 4294901760
    %660 = vmatprep.subr.mxu0 %v659
    %v661 = vand.u32 %v41, 4294901760
    %v662 = vsub.f32 %v41, %v661
    %v663 = vand.u32 %v662, 4294901760
    %v664 = vsub.f32 %v662, %v663
    %v665 = vand.u32 %v664, 4294901760
    %666 = vmatpush1.msra.mxu0 %v665
    %v667 = vand.u32 %v40, 4294901760
    %v668 = vsub.f32 %v40, %v667
    %v669 = vand.u32 %v668, 4294901760
    %v670 = vsub.f32 %v668, %v669
    %v671 = vand.u32 %v670, 4294901760
    %672 = vmatprep.subr.mxu0 %v671
    %v673 = vand.u32 %v39, 4294901760
    %v674 = vsub.f32 %v39, %v673
    %v675 = vand.u32 %v674, 4294901760
    %v676 = vsub.f32 %v674, %v675
    %v677 = vand.u32 %v676, 4294901760
    %678 = vmatpush1.msra.mxu0 %v677
    %v679 = vand.u32 %v38, 4294901760
    %v680 = vsub.f32 %v38, %v679
    %v681 = vand.u32 %v680, 4294901760
    %v682 = vsub.f32 %v680, %v681
    %v683 = vand.u32 %v682, 4294901760
    %684 = vmatprep.subr.mxu0 %v683
    %v685 = vand.u32 %v37, 4294901760
    %v686 = vsub.f32 %v37, %v685
    %v687 = vand.u32 %v686, 4294901760
    %v688 = vsub.f32 %v686, %v687
    %v689 = vand.u32 %v688, 4294901760
    %690 = vmatpush1.msra.mxu0 %v689
    %v691 = vand.u32 %v36, 4294901760
    %v692 = vsub.f32 %v36, %v691
    %v693 = vand.u32 %v692, 4294901760
    %v694 = vsub.f32 %v692, %v693
    %v695 = vand.u32 %v694, 4294901760
    %696 = vmatprep.subr.mxu0 %v695
    %v697 = vand.u32 %v35, 4294901760
    %v698 = vsub.f32 %v35, %v697
    %v699 = vand.u32 %v698, 4294901760
    %v700 = vsub.f32 %v698, %v699
    %v701 = vand.u32 %v700, 4294901760
    %702 = vmatpush1.msra.mxu0 %v701
    %703 = vmatprep.subr.mxu0 0.0
    %704 = vmatpush2.msra.mxu0 0.0
    %705 = vmatprep.subr.mxu0 0.0
    %706 = vmatpush2.msra.mxu0 0.0
    %707 = vmatprep.subr.mxu0 0.0
    %708 = vmatpush2.msra.mxu0 0.0
    %709 = vmatprep.subr.mxu0 0.0
    %710 = vmatpush2.msra.mxu0 0.0
    %711 = vmatprep.subr.mxu0 0.0
    %712 = vmatpush2.msra.mxu0 0.0
    %713 = vmatprep.subr.mxu0 0.0
    %714 = vmatpush2.msra.mxu0 0.0
    %715 = vmatprep.subr.mxu0 0.0
    %716 = vmatpush2.msra.mxu0 0.0
    %717 = vmatprep.subr.mxu0 0.0
    %718 = vmatpush2.msra.mxu0 0.0
    %719 = vmatprep.subr.mxu0 0.0
    %720 = vmatpush2.msra.mxu0 0.0
    %721 = vmatprep.subr.mxu0 0.0
    %722 = vmatpush2.msra.mxu0 0.0
    %723 = vmatprep.subr.mxu0 0.0
    %724 = vmatpush2.msra.mxu0 0.0
    %725 = vmatprep.subr.mxu0 0.0
    %726 = vmatpush2.msra.mxu0 0.0
    %727 = vmatprep.subr.mxu0 0.0
    %728 = vmatpush2.msra.mxu0 0.0
    %729 = vmatprep.subr.mxu0 0.0
    %730 = vmatpush2.msra.mxu0 0.0
    %731 = vmatprep.subr.mxu0 0.0
    %732 = vmatpush2.msra.mxu0 0.0
    %733 = vmatprep.subr.mxu0 0.0
    %734 = vmatpush2.msra.mxu0 0.0
    %735 = vmatprep.mubr.f32.mxu0 0.0
    %v736 = vand.u32 %v526, 4294901760
    %737 = vmatmul.mubr.f32.gmra.mxu0 %v736
    %v738 = vpop.f32.mrf.mxu0
    %v739 = vadd.f32 %v617, %v738
    %v740 = vpop.f32.mrf.mxu0
    %v741 = vadd.f32 %v619, %v740
    %742 = vdwg.mxu0
    %743 = vmatprep.subr.mxu0 0.0
    %744 = vmatpush1.msra.mxu0 0.0
    %745 = vmatprep.subr.mxu0 0.0
    %746 = vmatpush1.msra.mxu0 0.0
    %747 = vmatprep.subr.mxu0 0.0
    %748 = vmatpush1.msra.mxu0 0.0
    %749 = vmatprep.subr.mxu0 0.0
    %750 = vmatpush1.msra.mxu0 0.0
    %751 = vmatprep.subr.mxu0 0.0
    %752 = vmatpush1.msra.mxu0 0.0
    %753 = vmatprep.subr.mxu0 0.0
    %754 = vmatpush1.msra.mxu0 0.0
    %755 = vmatprep.subr.mxu0 0.0
    %756 = vmatpush1.msra.mxu0 0.0
    %757 = vmatprep.subr.mxu0 0.0
    %758 = vmatpush1.msra.mxu0 0.0
    %759 = vmatprep.subr.mxu0 0.0
    %760 = vmatpush1.msra.mxu0 0.0
    %761 = vmatprep.subr.mxu0 0.0
    %762 = vmatpush1.msra.mxu0 0.0
    %763 = vmatprep.subr.mxu0 0.0
    %764 = vmatpush1.msra.mxu0 0.0
    %v765 = vand.u32 %v533, 4294901760
    %v766 = vsub.f32 %v533, %v765
    %767 = vmatprep.subr.mxu0 %v766
    %v768 = vand.u32 %v530, 4294901760
    %v769 = vsub.f32 %v530, %v768
    %770 = vmatpush1.msra.mxu0 %v769
    %v771 = vand.u32 %v42, 4294901760
    %v772 = vsub.f32 %v42, %v771
    %773 = vmatprep.subr.mxu0 %v772
    %v774 = vand.u32 %v41, 4294901760
    %v775 = vsub.f32 %v41, %v774
    %776 = vmatpush1.msra.mxu0 %v775
    %v777 = vand.u32 %v40, 4294901760
    %v778 = vsub.f32 %v40, %v777
    %779 = vmatprep.subr.mxu0 %v778
    %v780 = vand.u32 %v39, 4294901760
    %v781 = vsub.f32 %v39, %v780
    %782 = vmatpush1.msra.mxu0 %v781
    %v783 = vand.u32 %v38, 4294901760
    %v784 = vsub.f32 %v38, %v783
    %785 = vmatprep.subr.mxu0 %v784
    %v786 = vand.u32 %v37, 4294901760
    %v787 = vsub.f32 %v37, %v786
    %788 = vmatpush1.msra.mxu0 %v787
    %v789 = vand.u32 %v36, 4294901760
    %v790 = vsub.f32 %v36, %v789
    %791 = vmatprep.subr.mxu0 %v790
    %v792 = vand.u32 %v35, 4294901760
    %v793 = vsub.f32 %v35, %v792
    %794 = vmatpush1.msra.mxu0 %v793
    %795 = vmatprep.subr.mxu0 0.0
    %796 = vmatpush2.msra.mxu0 0.0
    %797 = vmatprep.subr.mxu0 0.0
    %798 = vmatpush2.msra.mxu0 0.0
    %799 = vmatprep.subr.mxu0 0.0
    %800 = vmatpush2.msra.mxu0 0.0
    %801 = vmatprep.subr.mxu0 0.0
    %802 = vmatpush2.msra.mxu0 0.0
    %803 = vmatprep.subr.mxu0 0.0
    %804 = vmatpush2.msra.mxu0 0.0
    %805 = vmatprep.subr.mxu0 0.0
    %806 = vmatpush2.msra.mxu0 0.0
    %807 = vmatprep.subr.mxu0 0.0
    %808 = vmatpush2.msra.mxu0 0.0
    %809 = vmatprep.subr.mxu0 0.0
    %810 = vmatpush2.msra.mxu0 0.0
    %811 = vmatprep.subr.mxu0 0.0
    %812 = vmatpush2.msra.mxu0 0.0
    %813 = vmatprep.subr.mxu0 0.0
    %814 = vmatpush2.msra.mxu0 0.0
    %815 = vmatprep.subr.mxu0 0.0
    %816 = vmatpush2.msra.mxu0 0.0
    %817 = vmatprep.subr.mxu0 0.0
    %818 = vmatpush2.msra.mxu0 0.0
    %819 = vmatprep.subr.mxu0 0.0
    %820 = vmatpush2.msra.mxu0 0.0
    %821 = vmatprep.subr.mxu0 0.0
    %822 = vmatpush2.msra.mxu0 0.0
    %823 = vmatprep.subr.mxu0 0.0
    %824 = vmatpush2.msra.mxu0 0.0
    %825 = vmatprep.subr.mxu0 0.0
    %826 = vmatpush2.msra.mxu0 0.0
    %827 = vmatprep.mubr.f32.mxu0 0.0
    %v828 = vand.u32 %v526, 4294901760
    %v829 = vsub.f32 %v526, %v828
    %830 = vmatmul.mubr.f32.gmra.mxu0 %v829
    %v831 = vpop.f32.mrf.mxu0
    %v832 = vadd.f32 %v739, %v831
    %v833 = vpop.f32.mrf.mxu0
    %v834 = vadd.f32 %v741, %v833
    %835 = vdwg.mxu0
    %836 = vmatprep.subr.mxu0 0.0
    %837 = vmatpush1.msra.mxu0 0.0
    %838 = vmatprep.subr.mxu0 0.0
    %839 = vmatpush1.msra.mxu0 0.0
    %840 = vmatprep.subr.mxu0 0.0
    %841 = vmatpush1.msra.mxu0 0.0
    %842 = vmatprep.subr.mxu0 0.0
    %843 = vmatpush1.msra.mxu0 0.0
    %844 = vmatprep.subr.mxu0 0.0
    %845 = vmatpush1.msra.mxu0 0.0
    %846 = vmatprep.subr.mxu0 0.0
    %847 = vmatpush1.msra.mxu0 0.0
    %848 = vmatprep.subr.mxu0 0.0
    %849 = vmatpush1.msra.mxu0 0.0
    %850 = vmatprep.subr.mxu0 0.0
    %851 = vmatpush1.msra.mxu0 0.0
    %852 = vmatprep.subr.mxu0 0.0
    %853 = vmatpush1.msra.mxu0 0.0
    %854 = vmatprep.subr.mxu0 0.0
    %855 = vmatpush1.msra.mxu0 0.0
    %856 = vmatprep.subr.mxu0 0.0
    %857 = vmatpush1.msra.mxu0 0.0
    %v858 = vand.u32 %v533, 4294901760
    %859 = vmatprep.subr.mxu0 %v858
    %v860 = vand.u32 %v530, 4294901760
    %861 = vmatpush1.msra.mxu0 %v860
    %v862 = vand.u32 %v42, 4294901760
    %863 = vmatprep.subr.mxu0 %v862
    %v864 = vand.u32 %v41, 4294901760
    %865 = vmatpush1.msra.mxu0 %v864
    %v866 = vand.u32 %v40, 4294901760
    %867 = vmatprep.subr.mxu0 %v866
    %v868 = vand.u32 %v39, 4294901760
    %869 = vmatpush1.msra.mxu0 %v868
    %v870 = vand.u32 %v38, 4294901760
    %871 = vmatprep.subr.mxu0 %v870
    %v872 = vand.u32 %v37, 4294901760
    %873 = vmatpush1.msra.mxu0 %v872
    %v874 = vand.u32 %v36, 4294901760
    %875 = vmatprep.subr.mxu0 %v874
    %v876 = vand.u32 %v35, 4294901760
    %877 = vmatpush1.msra.mxu0 %v876
    %878 = vmatprep.subr.mxu0 0.0
    %879 = vmatpush2.msra.mxu0 0.0
    %880 = vmatprep.subr.mxu0 0.0
    %881 = vmatpush2.msra.mxu0 0.0
    %882 = vmatprep.subr.mxu0 0.0
    %883 = vmatpush2.msra.mxu0 0.0
    %884 = vmatprep.subr.mxu0 0.0
    %885 = vmatpush2.msra.mxu0 0.0
    %886 = vmatprep.subr.mxu0 0.0
    %887 = vmatpush2.msra.mxu0 0.0
    %888 = vmatprep.subr.mxu0 0.0
    %889 = vmatpush2.msra.mxu0 0.0
    %890 = vmatprep.subr.mxu0 0.0
    %891 = vmatpush2.msra.mxu0 0.0
    %892 = vmatprep.subr.mxu0 0.0
    %893 = vmatpush2.msra.mxu0 0.0
    %894 = vmatprep.subr.mxu0 0.0
    %895 = vmatpush2.msra.mxu0 0.0
    %896 = vmatprep.subr.mxu0 0.0
    %897 = vmatpush2.msra.mxu0 0.0
    %898 = vmatprep.subr.mxu0 0.0
    %899 = vmatpush2.msra.mxu0 0.0
    %900 = vmatprep.subr.mxu0 0.0
    %901 = vmatpush2.msra.mxu0 0.0
    %902 = vmatprep.subr.mxu0 0.0
    %903 = vmatpush2.msra.mxu0 0.0
    %904 = vmatprep.subr.mxu0 0.0
    %905 = vmatpush2.msra.mxu0 0.0
    %906 = vmatprep.subr.mxu0 0.0
    %907 = vmatpush2.msra.mxu0 0.0
    %908 = vmatprep.subr.mxu0 0.0
    %909 = vmatpush2.msra.mxu0 0.0
    %910 = vmatprep.mubr.f32.mxu0 0.0
    %v911 = vand.u32 %v526, 4294901760
    %v912 = vsub.f32 %v526, %v911
    %v913 = vand.u32 %v912, 4294901760
    %914 = vmatmul.mubr.f32.gmra.mxu0 %v913
    %v915 = vpop.f32.mrf.mxu0
    %v916 = vadd.f32 %v832, %v915
    %v917 = vpop.f32.mrf.mxu0
    %v918 = vadd.f32 %v834, %v917
    %919 = vdwg.mxu0
    %920 = vmatprep.subr.mxu0 0.0
    %921 = vmatpush1.msra.mxu0 0.0
    %922 = vmatprep.subr.mxu0 0.0
    %923 = vmatpush1.msra.mxu0 0.0
    %924 = vmatprep.subr.mxu0 0.0
    %925 = vmatpush1.msra.mxu0 0.0
    %926 = vmatprep.subr.mxu0 0.0
    %927 = vmatpush1.msra.mxu0 0.0
    %928 = vmatprep.subr.mxu0 0.0
    %929 = vmatpush1.msra.mxu0 0.0
    %930 = vmatprep.subr.mxu0 0.0
    %931 = vmatpush1.msra.mxu0 0.0
    %932 = vmatprep.subr.mxu0 0.0
    %933 = vmatpush1.msra.mxu0 0.0
    %934 = vmatprep.subr.mxu0 0.0
    %935 = vmatpush1.msra.mxu0 0.0
    %936 = vmatprep.subr.mxu0 0.0
    %937 = vmatpush1.msra.mxu0 0.0
    %938 = vmatprep.subr.mxu0 0.0
    %939 = vmatpush1.msra.mxu0 0.0
    %940 = vmatprep.subr.mxu0 0.0
    %941 = vmatpush1.msra.mxu0 0.0
    %v942 = vand.u32 %v533, 4294901760
    %v943 = vsub.f32 %v533, %v942
    %v944 = vand.u32 %v943, 4294901760
    %945 = vmatprep.subr.mxu0 %v944
    %v946 = vand.u32 %v530, 4294901760
    %v947 = vsub.f32 %v530, %v946
    %v948 = vand.u32 %v947, 4294901760
    %949 = vmatpush1.msra.mxu0 %v948
    %v950 = vand.u32 %v42, 4294901760
    %v951 = vsub.f32 %v42, %v950
    %v952 = vand.u32 %v951, 4294901760
    %953 = vmatprep.subr.mxu0 %v952
    %v954 = vand.u32 %v41, 4294901760
    %v955 = vsub.f32 %v41, %v954
    %v956 = vand.u32 %v955, 4294901760
    %957 = vmatpush1.msra.mxu0 %v956
    %v958 = vand.u32 %v40, 4294901760
    %v959 = vsub.f32 %v40, %v958
    %v960 = vand.u32 %v959, 4294901760
    %961 = vmatprep.subr.mxu0 %v960
    %v962 = vand.u32 %v39, 4294901760
    %v963 = vsub.f32 %v39, %v962
    %v964 = vand.u32 %v963, 4294901760
    %965 = vmatpush1.msra.mxu0 %v964
    %v966 = vand.u32 %v38, 4294901760
    %v967 = vsub.f32 %v38, %v966
    %v968 = vand.u32 %v967, 4294901760
    %969 = vmatprep.subr.mxu0 %v968
    %v970 = vand.u32 %v37, 4294901760
    %v971 = vsub.f32 %v37, %v970
    %v972 = vand.u32 %v971, 4294901760
    %973 = vmatpush1.msra.mxu0 %v972
    %v974 = vand.u32 %v36, 4294901760
    %v975 = vsub.f32 %v36, %v974
    %v976 = vand.u32 %v975, 4294901760
    %977 = vmatprep.subr.mxu0 %v976
    %v978 = vand.u32 %v35, 4294901760
    %v979 = vsub.f32 %v35, %v978
    %v980 = vand.u32 %v979, 4294901760
    %981 = vmatpush1.msra.mxu0 %v980
    %982 = vmatprep.subr.mxu0 0.0
    %983 = vmatpush2.msra.mxu0 0.0
    %984 = vmatprep.subr.mxu0 0.0
    %985 = vmatpush2.msra.mxu0 0.0
    %986 = vmatprep.subr.mxu0 0.0
    %987 = vmatpush2.msra.mxu0 0.0
    %988 = vmatprep.subr.mxu0 0.0
    %989 = vmatpush2.msra.mxu0 0.0
    %990 = vmatprep.subr.mxu0 0.0
    %991 = vmatpush2.msra.mxu0 0.0
    %992 = vmatprep.subr.mxu0 0.0
    %993 = vmatpush2.msra.mxu0 0.0
    %994 = vmatprep.subr.mxu0 0.0
    %995 = vmatpush2.msra.mxu0 0.0
    %996 = vmatprep.subr.mxu0 0.0
    %997 = vmatpush2.msra.mxu0 0.0
    %998 = vmatprep.subr.mxu0 0.0
    %999 = vmatpush2.msra.mxu0 0.0
    %1000 = vmatprep.subr.mxu0 0.0
    %1001 = vmatpush2.msra.mxu0 0.0
    %1002 = vmatprep.subr.mxu0 0.0
    %1003 = vmatpush2.msra.mxu0 0.0
    %1004 = vmatprep.subr.mxu0 0.0
    %1005 = vmatpush2.msra.mxu0 0.0
    %1006 = vmatprep.subr.mxu0 0.0
    %1007 = vmatpush2.msra.mxu0 0.0
    %1008 = vmatprep.subr.mxu0 0.0
    %1009 = vmatpush2.msra.mxu0 0.0
    %1010 = vmatprep.subr.mxu0 0.0
    %1011 = vmatpush2.msra.mxu0 0.0
    %1012 = vmatprep.subr.mxu0 0.0
    %1013 = vmatpush2.msra.mxu0 0.0
    %1014 = vmatprep.mubr.f32.mxu0 0.0
    %v1015 = vand.u32 %v526, 4294901760
    %1016 = vmatmul.mubr.f32.gmra.mxu0 %v1015
    %v1017 = vpop.f32.mrf.mxu0
    %v1018 = vadd.f32 %v916, %v1017
    %v1019 = vpop.f32.mrf.mxu0
    %v1020 = vadd.f32 %v918, %v1019
    %1021 = vdwg.mxu0
    %1022 = vmatprep.subr.mxu0 0.0
    %1023 = vmatpush1.msra.mxu0 0.0
    %1024 = vmatprep.subr.mxu0 0.0
    %1025 = vmatpush1.msra.mxu0 0.0
    %1026 = vmatprep.subr.mxu0 0.0
    %1027 = vmatpush1.msra.mxu0 0.0
    %1028 = vmatprep.subr.mxu0 0.0
    %1029 = vmatpush1.msra.mxu0 0.0
    %1030 = vmatprep.subr.mxu0 0.0
    %1031 = vmatpush1.msra.mxu0 0.0
    %1032 = vmatprep.subr.mxu0 0.0
    %1033 = vmatpush1.msra.mxu0 0.0
    %1034 = vmatprep.subr.mxu0 0.0
    %1035 = vmatpush1.msra.mxu0 0.0
    %1036 = vmatprep.subr.mxu0 0.0
    %1037 = vmatpush1.msra.mxu0 0.0
    %1038 = vmatprep.subr.mxu0 0.0
    %1039 = vmatpush1.msra.mxu0 0.0
    %1040 = vmatprep.subr.mxu0 0.0
    %1041 = vmatpush1.msra.mxu0 0.0
    %1042 = vmatprep.subr.mxu0 0.0
    %1043 = vmatpush1.msra.mxu0 0.0
    %v1044 = vand.u32 %v533, 4294901760
    %1045 = vmatprep.subr.mxu0 %v1044
    %v1046 = vand.u32 %v530, 4294901760
    %1047 = vmatpush1.msra.mxu0 %v1046
    %v1048 = vand.u32 %v42, 4294901760
    %1049 = vmatprep.subr.mxu0 %v1048
    %v1050 = vand.u32 %v41, 4294901760
    %1051 = vmatpush1.msra.mxu0 %v1050
    %v1052 = vand.u32 %v40, 4294901760
    %1053 = vmatprep.subr.mxu0 %v1052
    %v1054 = vand.u32 %v39, 4294901760
    %1055 = vmatpush1.msra.mxu0 %v1054
    %v1056 = vand.u32 %v38, 4294901760
    %1057 = vmatprep.subr.mxu0 %v1056
    %v1058 = vand.u32 %v37, 4294901760
    %1059 = vmatpush1.msra.mxu0 %v1058
    %v1060 = vand.u32 %v36, 4294901760
    %1061 = vmatprep.subr.mxu0 %v1060
    %v1062 = vand.u32 %v35, 4294901760
    %1063 = vmatpush1.msra.mxu0 %v1062
    %1064 = vmatprep.subr.mxu0 0.0
    %1065 = vmatpush2.msra.mxu0 0.0
    %1066 = vmatprep.subr.mxu0 0.0
    %1067 = vmatpush2.msra.mxu0 0.0
    %1068 = vmatprep.subr.mxu0 0.0
    %1069 = vmatpush2.msra.mxu0 0.0
    %1070 = vmatprep.subr.mxu0 0.0
    %1071 = vmatpush2.msra.mxu0 0.0
    %1072 = vmatprep.subr.mxu0 0.0
    %1073 = vmatpush2.msra.mxu0 0.0
    %1074 = vmatprep.subr.mxu0 0.0
    %1075 = vmatpush2.msra.mxu0 0.0
    %1076 = vmatprep.subr.mxu0 0.0
    %1077 = vmatpush2.msra.mxu0 0.0
    %1078 = vmatprep.subr.mxu0 0.0
    %1079 = vmatpush2.msra.mxu0 0.0
    %1080 = vmatprep.subr.mxu0 0.0
    %1081 = vmatpush2.msra.mxu0 0.0
    %1082 = vmatprep.subr.mxu0 0.0
    %1083 = vmatpush2.msra.mxu0 0.0
    %1084 = vmatprep.subr.mxu0 0.0
    %1085 = vmatpush2.msra.mxu0 0.0
    %1086 = vmatprep.subr.mxu0 0.0
    %1087 = vmatpush2.msra.mxu0 0.0
    %1088 = vmatprep.subr.mxu0 0.0
    %1089 = vmatpush2.msra.mxu0 0.0
    %1090 = vmatprep.subr.mxu0 0.0
    %1091 = vmatpush2.msra.mxu0 0.0
    %1092 = vmatprep.subr.mxu0 0.0
    %1093 = vmatpush2.msra.mxu0 0.0
    %1094 = vmatprep.subr.mxu0 0.0
    %1095 = vmatpush2.msra.mxu0 0.0
    %1096 = vmatprep.mubr.f32.mxu0 0.0
    %v1097 = vand.u32 %v526, 4294901760
    %1098 = vmatmul.mubr.f32.gmra.mxu0 %v1097
    %v1099 = vpop.f32.mrf.mxu0
    %v1100 = vadd.f32 %v1018, %v1099
    %v1101 = vpop.f32.mrf.mxu0
    %v1102 = vadd.f32 %v1020, %v1101
    %1103 = vdwg.mxu0
    %v1104 = vld [vmem:[%s4] ss:$8 sm:$0x3]
    %v1106 = vlaneseq
    %v1107 = vshrl.u32 %v1106, 7
    %v1108 = vsub.s32 0, %v1107
    %v1109 = vrot.slane %v1104, %v1108
    %v1110 = vlaneseq
    %v1111 = vshrl.u32 %v1110, 7
    %v1112 = vsub.s32 1, %v1111
    %v1113 = vrot.slane %v1104, %v1112
    %v1116 = vadd.f32 %v1100, %v1109
    %v1117 = vadd.f32 %v1102, %v1113
    %v1118 = vmax.f32 %v1116, 0.0
    %v1119 = vmax.f32 %v1117, 0.0
    %v1120 = vld [vmem:[#allocation2] sm:$0xff]
    %v1121 = vld [vmem:[#allocation2 + $0x8] sm:$0xff]
    %v1122 = vld [vmem:[#allocation2 + $0x10] sm:$0xff]
    %v1123 = vld [vmem:[#allocation2 + $0x18] sm:$0xff]
    %v1124 = vld [vmem:[#allocation2 + $0x20] sm:$0xff]
    %v1125 = vld [vmem:[#allocation2 + $0x28] sm:$0xff]
    %v1126 = vld [vmem:[#allocation2 + $0x30] sm:$0xff]
    %v1127 = vld [vmem:[#allocation2 + $0x38] sm:$0xff]
    %v1128 = vld [vmem:[#allocation2 + $0x40] sm:$0xff]
    %v1129 = vld [vmem:[#allocation2 + $0x48] sm:$0xff]
    %v1130 = vld [vmem:[#allocation2 + $0x50] sm:$0xff]
    %v1131 = vld [vmem:[#allocation2 + $0x58] sm:$0xff]
    %v1132 = vld [vmem:[#allocation2 + $0x60] sm:$0xff]
    %v1133 = vld [vmem:[#allocation2 + $0x68] sm:$0xff]
    %v1134 = vld [vmem:[#allocation2 + $0x70] sm:$0xff]
    %v1135 = vld [vmem:[#allocation2 + $0x78] sm:$0xff]
    %v1136 = vld [vmem:[%s4 + $0x1] ss:$0 sm:$0xff]
    %1137 = vmatprep.subr.mxu0 0.0
    %v1138 = vand.u32 %v1135, 4294901760
    %1139 = vmatpush1.msra.mxu0 %v1138
    %1140 = vmatprep.subr.mxu0 0.0
    %v1141 = vand.u32 %v1134, 4294901760
    %1142 = vmatpush1.msra.mxu0 %v1141
    %1143 = vmatprep.subr.mxu0 0.0
    %v1144 = vand.u32 %v1133, 4294901760
    %1145 = vmatpush1.msra.mxu0 %v1144
    %1146 = vmatprep.subr.mxu0 0.0
    %v1147 = vand.u32 %v1132, 4294901760
    %1148 = vmatpush1.msra.mxu0 %v1147
    %1149 = vmatprep.subr.mxu0 0.0
    %v1150 = vand.u32 %v1131, 4294901760
    %1151 = vmatpush1.msra.mxu0 %v1150
    %1152 = vmatprep.subr.mxu0 0.0
    %v1153 = vand.u32 %v1130, 4294901760
    %1154 = vmatpush1.msra.mxu0 %v1153
    %1155 = vmatprep.subr.mxu0 0.0
    %v1156 = vand.u32 %v1129, 4294901760
    %1157 = vmatpush1.msra.mxu0 %v1156
    %1158 = vmatprep.subr.mxu0 0.0
    %v1159 = vand.u32 %v1128, 4294901760
    %1160 = vmatpush1.msra.mxu0 %v1159
    %1161 = vmatprep.subr.mxu0 0.0
    %v1162 = vand.u32 %v1127, 4294901760
    %1163 = vmatpush1.msra.mxu0 %v1162
    %1164 = vmatprep.subr.mxu0 0.0
    %v1165 = vand.u32 %v1126, 4294901760
    %1166 = vmatpush1.msra.mxu0 %v1165
    %1167 = vmatprep.subr.mxu0 0.0
    %v1168 = vand.u32 %v1125, 4294901760
    %1169 = vmatpush1.msra.mxu0 %v1168
    %1170 = vmatprep.subr.mxu0 0.0
    %v1171 = vand.u32 %v1124, 4294901760
    %1172 = vmatpush1.msra.mxu0 %v1171
    %1173 = vmatprep.subr.mxu0 0.0
    %v1174 = vand.u32 %v1123, 4294901760
    %1175 = vmatpush1.msra.mxu0 %v1174
    %1176 = vmatprep.subr.mxu0 0.0
    %v1177 = vand.u32 %v1122, 4294901760
    %1178 = vmatpush1.msra.mxu0 %v1177
    %1179 = vmatprep.subr.mxu0 0.0
    %v1180 = vand.u32 %v1121, 4294901760
    %1181 = vmatpush1.msra.mxu0 %v1180
    %1182 = vmatprep.subr.mxu0 0.0
    %v1183 = vand.u32 %v1120, 4294901760
    %1184 = vmatpush1.msra.mxu0 %v1183
    %1185 = vmatprep.subr.mxu0 0.0
    %1186 = vmatpush2.msra.mxu0 0.0
    %1187 = vmatprep.subr.mxu0 0.0
    %1188 = vmatpush2.msra.mxu0 0.0
    %1189 = vmatprep.subr.mxu0 0.0
    %1190 = vmatpush2.msra.mxu0 0.0
    %1191 = vmatprep.subr.mxu0 0.0
    %1192 = vmatpush2.msra.mxu0 0.0
    %1193 = vmatprep.subr.mxu0 0.0
    %1194 = vmatpush2.msra.mxu0 0.0
    %1195 = vmatprep.subr.mxu0 0.0
    %1196 = vmatpush2.msra.mxu0 0.0
    %1197 = vmatprep.subr.mxu0 0.0
    %1198 = vmatpush2.msra.mxu0 0.0
    %1199 = vmatprep.subr.mxu0 0.0
    %1200 = vmatpush2.msra.mxu0 0.0
    %1201 = vmatprep.subr.mxu0 0.0
    %1202 = vmatpush2.msra.mxu0 0.0
    %1203 = vmatprep.subr.mxu0 0.0
    %1204 = vmatpush2.msra.mxu0 0.0
    %1205 = vmatprep.subr.mxu0 0.0
    %1206 = vmatpush2.msra.mxu0 0.0
    %1207 = vmatprep.subr.mxu0 0.0
    %1208 = vmatpush2.msra.mxu0 0.0
    %1209 = vmatprep.subr.mxu0 0.0
    %1210 = vmatpush2.msra.mxu0 0.0
    %1211 = vmatprep.subr.mxu0 0.0
    %1212 = vmatpush2.msra.mxu0 0.0
    %1213 = vmatprep.subr.mxu0 0.0
    %1214 = vmatpush2.msra.mxu0 0.0
    %1215 = vmatprep.subr.mxu0 0.0
    %1216 = vmatpush2.msra.mxu0 0.0
    %1217 = vmatprep.mubr.f32.mxu0 0.0
    %v1218 = vand.u32 %v1118, 4294901760
    %v1219 = vsub.f32 %v1118, %v1218
    %v1220 = vand.u32 %v1219, 4294901760
    %v1221 = vsub.f32 %v1219, %v1220
    %v1222 = vand.u32 %v1221, 4294901760
    %1223 = vmatmul.mubr.f32.gmra.mxu0 %v1222
    %v1224 = vpop.f32.mrf.mxu0
    %v1225 = vadd.f32 %v1136, %v1224
    %v1226 = vpop.f32.mrf.mxu0
    %1227 = vdwg.mxu0
    %1228 = vmatprep.subr.mxu0 0.0
    %v1229 = vand.u32 %v1135, 4294901760
    %v1230 = vsub.f32 %v1135, %v1229
    %v1231 = vand.u32 %v1230, 4294901760
    %v1232 = vsub.f32 %v1230, %v1231
    %v1233 = vand.u32 %v1232, 4294901760
    %1234 = vmatpush1.msra.mxu0 %v1233
    %1235 = vmatprep.subr.mxu0 0.0
    %v1236 = vand.u32 %v1134, 4294901760
    %v1237 = vsub.f32 %v1134, %v1236
    %v1238 = vand.u32 %v1237, 4294901760
    %v1239 = vsub.f32 %v1237, %v1238
    %v1240 = vand.u32 %v1239, 4294901760
    %1241 = vmatpush1.msra.mxu0 %v1240
    %1242 = vmatprep.subr.mxu0 0.0
    %v1243 = vand.u32 %v1133, 4294901760
    %v1244 = vsub.f32 %v1133, %v1243
    %v1245 = vand.u32 %v1244, 4294901760
    %v1246 = vsub.f32 %v1244, %v1245
    %v1247 = vand.u32 %v1246, 4294901760
    %1248 = vmatpush1.msra.mxu0 %v1247
    %1249 = vmatprep.subr.mxu0 0.0
    %v1250 = vand.u32 %v1132, 4294901760
    %v1251 = vsub.f32 %v1132, %v1250
    %v1252 = vand.u32 %v1251, 4294901760
    %v1253 = vsub.f32 %v1251, %v1252
    %v1254 = vand.u32 %v1253, 4294901760
    %1255 = vmatpush1.msra.mxu0 %v1254
    %1256 = vmatprep.subr.mxu0 0.0
    %v1257 = vand.u32 %v1131, 4294901760
    %v1258 = vsub.f32 %v1131, %v1257
    %v1259 = vand.u32 %v1258, 4294901760
    %v1260 = vsub.f32 %v1258, %v1259
    %v1261 = vand.u32 %v1260, 4294901760
    %1262 = vmatpush1.msra.mxu0 %v1261
    %1263 = vmatprep.subr.mxu0 0.0
    %v1264 = vand.u32 %v1130, 4294901760
    %v1265 = vsub.f32 %v1130, %v1264
    %v1266 = vand.u32 %v1265, 4294901760
    %v1267 = vsub.f32 %v1265, %v1266
    %v1268 = vand.u32 %v1267, 4294901760
    %1269 = vmatpush1.msra.mxu0 %v1268
    %1270 = vmatprep.subr.mxu0 0.0
    %v1271 = vand.u32 %v1129, 4294901760
    %v1272 = vsub.f32 %v1129, %v1271
    %v1273 = vand.u32 %v1272, 4294901760
    %v1274 = vsub.f32 %v1272, %v1273
    %v1275 = vand.u32 %v1274, 4294901760
    %1276 = vmatpush1.msra.mxu0 %v1275
    %1277 = vmatprep.subr.mxu0 0.0
    %v1278 = vand.u32 %v1128, 4294901760
    %v1279 = vsub.f32 %v1128, %v1278
    %v1280 = vand.u32 %v1279, 4294901760
    %v1281 = vsub.f32 %v1279, %v1280
    %v1282 = vand.u32 %v1281, 4294901760
    %1283 = vmatpush1.msra.mxu0 %v1282
    %1284 = vmatprep.subr.mxu0 0.0
    %v1285 = vand.u32 %v1127, 4294901760
    %v1286 = vsub.f32 %v1127, %v1285
    %v1287 = vand.u32 %v1286, 4294901760
    %v1288 = vsub.f32 %v1286, %v1287
    %v1289 = vand.u32 %v1288, 4294901760
    %1290 = vmatpush1.msra.mxu0 %v1289
    %1291 = vmatprep.subr.mxu0 0.0
    %v1292 = vand.u32 %v1126, 4294901760
    %v1293 = vsub.f32 %v1126, %v1292
    %v1294 = vand.u32 %v1293, 4294901760
    %v1295 = vsub.f32 %v1293, %v1294
    %v1296 = vand.u32 %v1295, 4294901760
    %1297 = vmatpush1.msra.mxu0 %v1296
    %1298 = vmatprep.subr.mxu0 0.0
    %v1299 = vand.u32 %v1125, 4294901760
    %v1300 = vsub.f32 %v1125, %v1299
    %v1301 = vand.u32 %v1300, 4294901760
    %v1302 = vsub.f32 %v1300, %v1301
    %v1303 = vand.u32 %v1302, 4294901760
    %1304 = vmatpush1.msra.mxu0 %v1303
    %1305 = vmatprep.subr.mxu0 0.0
    %v1306 = vand.u32 %v1124, 4294901760
    %v1307 = vsub.f32 %v1124, %v1306
    %v1308 = vand.u32 %v1307, 4294901760
    %v1309 = vsub.f32 %v1307, %v1308
    %v1310 = vand.u32 %v1309, 4294901760
    %1311 = vmatpush1.msra.mxu0 %v1310
    %1312 = vmatprep.subr.mxu0 0.0
    %v1313 = vand.u32 %v1123, 4294901760
    %v1314 = vsub.f32 %v1123, %v1313
    %v1315 = vand.u32 %v1314, 4294901760
    %v1316 = vsub.f32 %v1314, %v1315
    %v1317 = vand.u32 %v1316, 4294901760
    %1318 = vmatpush1.msra.mxu0 %v1317
    %1319 = vmatprep.subr.mxu0 0.0
    %v1320 = vand.u32 %v1122, 4294901760
    %v1321 = vsub.f32 %v1122, %v1320
    %v1322 = vand.u32 %v1321, 4294901760
    %v1323 = vsub.f32 %v1321, %v1322
    %v1324 = vand.u32 %v1323, 4294901760
    %1325 = vmatpush1.msra.mxu0 %v1324
    %1326 = vmatprep.subr.mxu0 0.0
    %v1327 = vand.u32 %v1121, 4294901760
    %v1328 = vsub.f32 %v1121, %v1327
    %v1329 = vand.u32 %v1328, 4294901760
    %v1330 = vsub.f32 %v1328, %v1329
    %v1331 = vand.u32 %v1330, 4294901760
    %1332 = vmatpush1.msra.mxu0 %v1331
    %1333 = vmatprep.subr.mxu0 0.0
    %v1334 = vand.u32 %v1120, 4294901760
    %v1335 = vsub.f32 %v1120, %v1334
    %v1336 = vand.u32 %v1335, 4294901760
    %v1337 = vsub.f32 %v1335, %v1336
    %v1338 = vand.u32 %v1337, 4294901760
    %1339 = vmatpush1.msra.mxu0 %v1338
    %1340 = vmatprep.subr.mxu0 0.0
    %1341 = vmatpush2.msra.mxu0 0.0
    %1342 = vmatprep.subr.mxu0 0.0
    %1343 = vmatpush2.msra.mxu0 0.0
    %1344 = vmatprep.subr.mxu0 0.0
    %1345 = vmatpush2.msra.mxu0 0.0
    %1346 = vmatprep.subr.mxu0 0.0
    %1347 = vmatpush2.msra.mxu0 0.0
    %1348 = vmatprep.subr.mxu0 0.0
    %1349 = vmatpush2.msra.mxu0 0.0
    %1350 = vmatprep.subr.mxu0 0.0
    %1351 = vmatpush2.msra.mxu0 0.0
    %1352 = vmatprep.subr.mxu0 0.0
    %1353 = vmatpush2.msra.mxu0 0.0
    %1354 = vmatprep.subr.mxu0 0.0
    %1355 = vmatpush2.msra.mxu0 0.0
    %1356 = vmatprep.subr.mxu0 0.0
    %1357 = vmatpush2.msra.mxu0 0.0
    %1358 = vmatprep.subr.mxu0 0.0
    %1359 = vmatpush2.msra.mxu0 0.0
    %1360 = vmatprep.subr.mxu0 0.0
    %1361 = vmatpush2.msra.mxu0 0.0
    %1362 = vmatprep.subr.mxu0 0.0
    %1363 = vmatpush2.msra.mxu0 0.0
    %1364 = vmatprep.subr.mxu0 0.0
    %1365 = vmatpush2.msra.mxu0 0.0
    %1366 = vmatprep.subr.mxu0 0.0
    %1367 = vmatpush2.msra.mxu0 0.0
    %1368 = vmatprep.subr.mxu0 0.0
    %1369 = vmatpush2.msra.mxu0 0.0
    %1370 = vmatprep.subr.mxu0 0.0
    %1371 = vmatpush2.msra.mxu0 0.0
    %1372 = vmatprep.mubr.f32.mxu0 0.0
    %v1373 = vand.u32 %v1118, 4294901760
    %1374 = vmatmul.mubr.f32.gmra.mxu0 %v1373
    %v1375 = vpop.f32.mrf.mxu0
    %v1376 = vadd.f32 %v1225, %v1375
    %v1377 = vpop.f32.mrf.mxu0
    %1378 = vdwg.mxu0
    %1379 = vmatprep.subr.mxu0 0.0
    %v1380 = vand.u32 %v1135, 4294901760
    %v1381 = vsub.f32 %v1135, %v1380
    %1382 = vmatpush1.msra.mxu0 %v1381
    %1383 = vmatprep.subr.mxu0 0.0
    %v1384 = vand.u32 %v1134, 4294901760
    %v1385 = vsub.f32 %v1134, %v1384
    %1386 = vmatpush1.msra.mxu0 %v1385
    %1387 = vmatprep.subr.mxu0 0.0
    %v1388 = vand.u32 %v1133, 4294901760
    %v1389 = vsub.f32 %v1133, %v1388
    %1390 = vmatpush1.msra.mxu0 %v1389
    %1391 = vmatprep.subr.mxu0 0.0
    %v1392 = vand.u32 %v1132, 4294901760
    %v1393 = vsub.f32 %v1132, %v1392
    %1394 = vmatpush1.msra.mxu0 %v1393
    %1395 = vmatprep.subr.mxu0 0.0
    %v1396 = vand.u32 %v1131, 4294901760
    %v1397 = vsub.f32 %v1131, %v1396
    %1398 = vmatpush1.msra.mxu0 %v1397
    %1399 = vmatprep.subr.mxu0 0.0
    %v1400 = vand.u32 %v1130, 4294901760
    %v1401 = vsub.f32 %v1130, %v1400
    %1402 = vmatpush1.msra.mxu0 %v1401
    %1403 = vmatprep.subr.mxu0 0.0
    %v1404 = vand.u32 %v1129, 4294901760
    %v1405 = vsub.f32 %v1129, %v1404
    %1406 = vmatpush1.msra.mxu0 %v1405
    %1407 = vmatprep.subr.mxu0 0.0
    %v1408 = vand.u32 %v1128, 4294901760
    %v1409 = vsub.f32 %v1128, %v1408
    %1410 = vmatpush1.msra.mxu0 %v1409
    %1411 = vmatprep.subr.mxu0 0.0
    %v1412 = vand.u32 %v1127, 4294901760
    %v1413 = vsub.f32 %v1127, %v1412
    %1414 = vmatpush1.msra.mxu0 %v1413
    %1415 = vmatprep.subr.mxu0 0.0
    %v1416 = vand.u32 %v1126, 4294901760
    %v1417 = vsub.f32 %v1126, %v1416
    %1418 = vmatpush1.msra.mxu0 %v1417
    %1419 = vmatprep.subr.mxu0 0.0
    %v1420 = vand.u32 %v1125, 4294901760
    %v1421 = vsub.f32 %v1125, %v1420
    %1422 = vmatpush1.msra.mxu0 %v1421
    %1423 = vmatprep.subr.mxu0 0.0
    %v1424 = vand.u32 %v1124, 4294901760
    %v1425 = vsub.f32 %v1124, %v1424
    %1426 = vmatpush1.msra.mxu0 %v1425
    %1427 = vmatprep.subr.mxu0 0.0
    %v1428 = vand.u32 %v1123, 4294901760
    %v1429 = vsub.f32 %v1123, %v1428
    %1430 = vmatpush1.msra.mxu0 %v1429
    %1431 = vmatprep.subr.mxu0 0.0
    %v1432 = vand.u32 %v1122, 4294901760
    %v1433 = vsub.f32 %v1122, %v1432
    %1434 = vmatpush1.msra.mxu0 %v1433
    %1435 = vmatprep.subr.mxu0 0.0
    %v1436 = vand.u32 %v1121, 4294901760
    %v1437 = vsub.f32 %v1121, %v1436
    %1438 = vmatpush1.msra.mxu0 %v1437
    %1439 = vmatprep.subr.mxu0 0.0
    %v1440 = vand.u32 %v1120, 4294901760
    %v1441 = vsub.f32 %v1120, %v1440
    %1442 = vmatpush1.msra.mxu0 %v1441
    %1443 = vmatprep.subr.mxu0 0.0
    %1444 = vmatpush2.msra.mxu0 0.0
    %1445 = vmatprep.subr.mxu0 0.0
    %1446 = vmatpush2.msra.mxu0 0.0
    %1447 = vmatprep.subr.mxu0 0.0
    %1448 = vmatpush2.msra.mxu0 0.0
    %1449 = vmatprep.subr.mxu0 0.0
    %1450 = vmatpush2.msra.mxu0 0.0
    %1451 = vmatprep.subr.mxu0 0.0
    %1452 = vmatpush2.msra.mxu0 0.0
    %1453 = vmatprep.subr.mxu0 0.0
    %1454 = vmatpush2.msra.mxu0 0.0
    %1455 = vmatprep.subr.mxu0 0.0
    %1456 = vmatpush2.msra.mxu0 0.0
    %1457 = vmatprep.subr.mxu0 0.0
    %1458 = vmatpush2.msra.mxu0 0.0
    %1459 = vmatprep.subr.mxu0 0.0
    %1460 = vmatpush2.msra.mxu0 0.0
    %1461 = vmatprep.subr.mxu0 0.0
    %1462 = vmatpush2.msra.mxu0 0.0
    %1463 = vmatprep.subr.mxu0 0.0
    %1464 = vmatpush2.msra.mxu0 0.0
    %1465 = vmatprep.subr.mxu0 0.0
    %1466 = vmatpush2.msra.mxu0 0.0
    %1467 = vmatprep.subr.mxu0 0.0
    %1468 = vmatpush2.msra.mxu0 0.0
    %1469 = vmatprep.subr.mxu0 0.0
    %1470 = vmatpush2.msra.mxu0 0.0
    %1471 = vmatprep.subr.mxu0 0.0
    %1472 = vmatpush2.msra.mxu0 0.0
    %1473 = vmatprep.subr.mxu0 0.0
    %1474 = vmatpush2.msra.mxu0 0.0
    %1475 = vmatprep.mubr.f32.mxu0 0.0
    %v1476 = vand.u32 %v1118, 4294901760
    %v1477 = vsub.f32 %v1118, %v1476
    %1478 = vmatmul.mubr.f32.gmra.mxu0 %v1477
    %v1479 = vpop.f32.mrf.mxu0
    %v1480 = vadd.f32 %v1376, %v1479
    %v1481 = vpop.f32.mrf.mxu0
    %1482 = vdwg.mxu0
    %1483 = vmatprep.subr.mxu0 0.0
    %v1484 = vand.u32 %v1135, 4294901760
    %1485 = vmatpush1.msra.mxu0 %v1484
    %1486 = vmatprep.subr.mxu0 0.0
    %v1487 = vand.u32 %v1134, 4294901760
    %1488 = vmatpush1.msra.mxu0 %v1487
    %1489 = vmatprep.subr.mxu0 0.0
    %v1490 = vand.u32 %v1133, 4294901760
    %1491 = vmatpush1.msra.mxu0 %v1490
    %1492 = vmatprep.subr.mxu0 0.0
    %v1493 = vand.u32 %v1132, 4294901760
    %1494 = vmatpush1.msra.mxu0 %v1493
    %1495 = vmatprep.subr.mxu0 0.0
    %v1496 = vand.u32 %v1131, 4294901760
    %1497 = vmatpush1.msra.mxu0 %v1496
    %1498 = vmatprep.subr.mxu0 0.0
    %v1499 = vand.u32 %v1130, 4294901760
    %1500 = vmatpush1.msra.mxu0 %v1499
    %1501 = vmatprep.subr.mxu0 0.0
    %v1502 = vand.u32 %v1129, 4294901760
    %1503 = vmatpush1.msra.mxu0 %v1502
    %1504 = vmatprep.subr.mxu0 0.0
    %v1505 = vand.u32 %v1128, 4294901760
    %1506 = vmatpush1.msra.mxu0 %v1505
    %1507 = vmatprep.subr.mxu0 0.0
    %v1508 = vand.u32 %v1127, 4294901760
    %1509 = vmatpush1.msra.mxu0 %v1508
    %1510 = vmatprep.subr.mxu0 0.0
    %v1511 = vand.u32 %v1126, 4294901760
    %1512 = vmatpush1.msra.mxu0 %v1511
    %1513 = vmatprep.subr.mxu0 0.0
    %v1514 = vand.u32 %v1125, 4294901760
    %1515 = vmatpush1.msra.mxu0 %v1514
    %1516 = vmatprep.subr.mxu0 0.0
    %v1517 = vand.u32 %v1124, 4294901760
    %1518 = vmatpush1.msra.mxu0 %v1517
    %1519 = vmatprep.subr.mxu0 0.0
    %v1520 = vand.u32 %v1123, 4294901760
    %1521 = vmatpush1.msra.mxu0 %v1520
    %1522 = vmatprep.subr.mxu0 0.0
    %v1523 = vand.u32 %v1122, 4294901760
    %1524 = vmatpush1.msra.mxu0 %v1523
    %1525 = vmatprep.subr.mxu0 0.0
    %v1526 = vand.u32 %v1121, 4294901760
    %1527 = vmatpush1.msra.mxu0 %v1526
    %1528 = vmatprep.subr.mxu0 0.0
    %v1529 = vand.u32 %v1120, 4294901760
    %1530 = vmatpush1.msra.mxu0 %v1529
    %1531 = vmatprep.subr.mxu0 0.0
    %1532 = vmatpush2.msra.mxu0 0.0
    %1533 = vmatprep.subr.mxu0 0.0
    %1534 = vmatpush2.msra.mxu0 0.0
    %1535 = vmatprep.subr.mxu0 0.0
    %1536 = vmatpush2.msra.mxu0 0.0
    %1537 = vmatprep.subr.mxu0 0.0
    %1538 = vmatpush2.msra.mxu0 0.0
    %1539 = vmatprep.subr.mxu0 0.0
    %1540 = vmatpush2.msra.mxu0 0.0
    %1541 = vmatprep.subr.mxu0 0.0
    %1542 = vmatpush2.msra.mxu0 0.0
    %1543 = vmatprep.subr.mxu0 0.0
    %1544 = vmatpush2.msra.mxu0 0.0
    %1545 = vmatprep.subr.mxu0 0.0
    %1546 = vmatpush2.msra.mxu0 0.0
    %1547 = vmatprep.subr.mxu0 0.0
    %1548 = vmatpush2.msra.mxu0 0.0
    %1549 = vmatprep.subr.mxu0 0.0
    %1550 = vmatpush2.msra.mxu0 0.0
    %1551 = vmatprep.subr.mxu0 0.0
    %1552 = vmatpush2.msra.mxu0 0.0
    %1553 = vmatprep.subr.mxu0 0.0
    %1554 = vmatpush2.msra.mxu0 0.0
    %1555 = vmatprep.subr.mxu0 0.0
    %1556 = vmatpush2.msra.mxu0 0.0
    %1557 = vmatprep.subr.mxu0 0.0
    %1558 = vmatpush2.msra.mxu0 0.0
    %1559 = vmatprep.subr.mxu0 0.0
    %1560 = vmatpush2.msra.mxu0 0.0
    %1561 = vmatprep.subr.mxu0 0.0
    %1562 = vmatpush2.msra.mxu0 0.0
    %1563 = vmatprep.mubr.f32.mxu0 0.0
    %v1564 = vand.u32 %v1118, 4294901760
    %v1565 = vsub.f32 %v1118, %v1564
    %v1566 = vand.u32 %v1565, 4294901760
    %1567 = vmatmul.mubr.f32.gmra.mxu0 %v1566
    %v1568 = vpop.f32.mrf.mxu0
    %v1569 = vadd.f32 %v1480, %v1568
    %v1570 = vpop.f32.mrf.mxu0
    %1571 = vdwg.mxu0
    %1572 = vmatprep.subr.mxu0 0.0
    %v1573 = vand.u32 %v1135, 4294901760
    %v1574 = vsub.f32 %v1135, %v1573
    %v1575 = vand.u32 %v1574, 4294901760
    %1576 = vmatpush1.msra.mxu0 %v1575
    %1577 = vmatprep.subr.mxu0 0.0
    %v1578 = vand.u32 %v1134, 4294901760
    %v1579 = vsub.f32 %v1134, %v1578
    %v1580 = vand.u32 %v1579, 4294901760
    %1581 = vmatpush1.msra.mxu0 %v1580
    %1582 = vmatprep.subr.mxu0 0.0
    %v1583 = vand.u32 %v1133, 4294901760
    %v1584 = vsub.f32 %v1133, %v1583
    %v1585 = vand.u32 %v1584, 4294901760
    %1586 = vmatpush1.msra.mxu0 %v1585
    %1587 = vmatprep.subr.mxu0 0.0
    %v1588 = vand.u32 %v1132, 4294901760
    %v1589 = vsub.f32 %v1132, %v1588
    %v1590 = vand.u32 %v1589, 4294901760
    %1591 = vmatpush1.msra.mxu0 %v1590
    %1592 = vmatprep.subr.mxu0 0.0
    %v1593 = vand.u32 %v1131, 4294901760
    %v1594 = vsub.f32 %v1131, %v1593
    %v1595 = vand.u32 %v1594, 4294901760
    %1596 = vmatpush1.msra.mxu0 %v1595
    %1597 = vmatprep.subr.mxu0 0.0
    %v1598 = vand.u32 %v1130, 4294901760
    %v1599 = vsub.f32 %v1130, %v1598
    %v1600 = vand.u32 %v1599, 4294901760
    %1601 = vmatpush1.msra.mxu0 %v1600
    %1602 = vmatprep.subr.mxu0 0.0
    %v1603 = vand.u32 %v1129, 4294901760
    %v1604 = vsub.f32 %v1129, %v1603
    %v1605 = vand.u32 %v1604, 4294901760
    %1606 = vmatpush1.msra.mxu0 %v1605
    %1607 = vmatprep.subr.mxu0 0.0
    %v1608 = vand.u32 %v1128, 4294901760
    %v1609 = vsub.f32 %v1128, %v1608
    %v1610 = vand.u32 %v1609, 4294901760
    %1611 = vmatpush1.msra.mxu0 %v1610
    %1612 = vmatprep.subr.mxu0 0.0
    %v1613 = vand.u32 %v1127, 4294901760
    %v1614 = vsub.f32 %v1127, %v1613
    %v1615 = vand.u32 %v1614, 4294901760
    %1616 = vmatpush1.msra.mxu0 %v1615
    %1617 = vmatprep.subr.mxu0 0.0
    %v1618 = vand.u32 %v1126, 4294901760
    %v1619 = vsub.f32 %v1126, %v1618
    %v1620 = vand.u32 %v1619, 4294901760
    %1621 = vmatpush1.msra.mxu0 %v1620
    %1622 = vmatprep.subr.mxu0 0.0
    %v1623 = vand.u32 %v1125, 4294901760
    %v1624 = vsub.f32 %v1125, %v1623
    %v1625 = vand.u32 %v1624, 4294901760
    %1626 = vmatpush1.msra.mxu0 %v1625
    %1627 = vmatprep.subr.mxu0 0.0
    %v1628 = vand.u32 %v1124, 4294901760
    %v1629 = vsub.f32 %v1124, %v1628
    %v1630 = vand.u32 %v1629, 4294901760
    %1631 = vmatpush1.msra.mxu0 %v1630
    %1632 = vmatprep.subr.mxu0 0.0
    %v1633 = vand.u32 %v1123, 4294901760
    %v1634 = vsub.f32 %v1123, %v1633
    %v1635 = vand.u32 %v1634, 4294901760
    %1636 = vmatpush1.msra.mxu0 %v1635
    %1637 = vmatprep.subr.mxu0 0.0
    %v1638 = vand.u32 %v1122, 4294901760
    %v1639 = vsub.f32 %v1122, %v1638
    %v1640 = vand.u32 %v1639, 4294901760
    %1641 = vmatpush1.msra.mxu0 %v1640
    %1642 = vmatprep.subr.mxu0 0.0
    %v1643 = vand.u32 %v1121, 4294901760
    %v1644 = vsub.f32 %v1121, %v1643
    %v1645 = vand.u32 %v1644, 4294901760
    %1646 = vmatpush1.msra.mxu0 %v1645
    %1647 = vmatprep.subr.mxu0 0.0
    %v1648 = vand.u32 %v1120, 4294901760
    %v1649 = vsub.f32 %v1120, %v1648
    %v1650 = vand.u32 %v1649, 4294901760
    %1651 = vmatpush1.msra.mxu0 %v1650
    %1652 = vmatprep.subr.mxu0 0.0
    %1653 = vmatpush2.msra.mxu0 0.0
    %1654 = vmatprep.subr.mxu0 0.0
    %1655 = vmatpush2.msra.mxu0 0.0
    %1656 = vmatprep.subr.mxu0 0.0
    %1657 = vmatpush2.msra.mxu0 0.0
    %1658 = vmatprep.subr.mxu0 0.0
    %1659 = vmatpush2.msra.mxu0 0.0
    %1660 = vmatprep.subr.mxu0 0.0
    %1661 = vmatpush2.msra.mxu0 0.0
    %1662 = vmatprep.subr.mxu0 0.0
    %1663 = vmatpush2.msra.mxu0 0.0
    %1664 = vmatprep.subr.mxu0 0.0
    %1665 = vmatpush2.msra.mxu0 0.0
    %1666 = vmatprep.subr.mxu0 0.0
    %1667 = vmatpush2.msra.mxu0 0.0
    %1668 = vmatprep.subr.mxu0 0.0
    %1669 = vmatpush2.msra.mxu0 0.0
    %1670 = vmatprep.subr.mxu0 0.0
    %1671 = vmatpush2.msra.mxu0 0.0
    %1672 = vmatprep.subr.mxu0 0.0
    %1673 = vmatpush2.msra.mxu0 0.0
    %1674 = vmatprep.subr.mxu0 0.0
    %1675 = vmatpush2.msra.mxu0 0.0
    %1676 = vmatprep.subr.mxu0 0.0
    %1677 = vmatpush2.msra.mxu0 0.0
    %1678 = vmatprep.subr.mxu0 0.0
    %1679 = vmatpush2.msra.mxu0 0.0
    %1680 = vmatprep.subr.mxu0 0.0
    %1681 = vmatpush2.msra.mxu0 0.0
    %1682 = vmatprep.subr.mxu0 0.0
    %1683 = vmatpush2.msra.mxu0 0.0
    %1684 = vmatprep.mubr.f32.mxu0 0.0
    %v1685 = vand.u32 %v1118, 4294901760
    %1686 = vmatmul.mubr.f32.gmra.mxu0 %v1685
    %v1687 = vpop.f32.mrf.mxu0
    %v1688 = vadd.f32 %v1569, %v1687
    %v1689 = vpop.f32.mrf.mxu0
    %1690 = vdwg.mxu0
    %1691 = vmatprep.subr.mxu0 0.0
    %v1692 = vand.u32 %v1135, 4294901760
    %1693 = vmatpush1.msra.mxu0 %v1692
    %1694 = vmatprep.subr.mxu0 0.0
    %v1695 = vand.u32 %v1134, 4294901760
    %1696 = vmatpush1.msra.mxu0 %v1695
    %1697 = vmatprep.subr.mxu0 0.0
    %v1698 = vand.u32 %v1133, 4294901760
    %1699 = vmatpush1.msra.mxu0 %v1698
    %1700 = vmatprep.subr.mxu0 0.0
    %v1701 = vand.u32 %v1132, 4294901760
    %1702 = vmatpush1.msra.mxu0 %v1701
    %1703 = vmatprep.subr.mxu0 0.0
    %v1704 = vand.u32 %v1131, 4294901760
    %1705 = vmatpush1.msra.mxu0 %v1704
    %1706 = vmatprep.subr.mxu0 0.0
    %v1707 = vand.u32 %v1130, 4294901760
    %1708 = vmatpush1.msra.mxu0 %v1707
    %1709 = vmatprep.subr.mxu0 0.0
    %v1710 = vand.u32 %v1129, 4294901760
    %1711 = vmatpush1.msra.mxu0 %v1710
    %1712 = vmatprep.subr.mxu0 0.0
    %v1713 = vand.u32 %v1128, 4294901760
    %1714 = vmatpush1.msra.mxu0 %v1713
    %1715 = vmatprep.subr.mxu0 0.0
    %v1716 = vand.u32 %v1127, 4294901760
    %1717 = vmatpush1.msra.mxu0 %v1716
    %1718 = vmatprep.subr.mxu0 0.0
    %v1719 = vand.u32 %v1126, 4294901760
    %1720 = vmatpush1.msra.mxu0 %v1719
    %1721 = vmatprep.subr.mxu0 0.0
    %v1722 = vand.u32 %v1125, 4294901760
    %1723 = vmatpush1.msra.mxu0 %v1722
    %1724 = vmatprep.subr.mxu0 0.0
    %v1725 = vand.u32 %v1124, 4294901760
    %1726 = vmatpush1.msra.mxu0 %v1725
    %1727 = vmatprep.subr.mxu0 0.0
    %v1728 = vand.u32 %v1123, 4294901760
    %1729 = vmatpush1.msra.mxu0 %v1728
    %1730 = vmatprep.subr.mxu0 0.0
    %v1731 = vand.u32 %v1122, 4294901760
    %1732 = vmatpush1.msra.mxu0 %v1731
    %1733 = vmatprep.subr.mxu0 0.0
    %v1734 = vand.u32 %v1121, 4294901760
    %1735 = vmatpush1.msra.mxu0 %v1734
    %1736 = vmatprep.subr.mxu0 0.0
    %v1737 = vand.u32 %v1120, 4294901760
    %1738 = vmatpush1.msra.mxu0 %v1737
    %1739 = vmatprep.subr.mxu0 0.0
    %1740 = vmatpush2.msra.mxu0 0.0
    %1741 = vmatprep.subr.mxu0 0.0
    %1742 = vmatpush2.msra.mxu0 0.0
    %1743 = vmatprep.subr.mxu0 0.0
    %1744 = vmatpush2.msra.mxu0 0.0
    %1745 = vmatprep.subr.mxu0 0.0
    %1746 = vmatpush2.msra.mxu0 0.0
    %1747 = vmatprep.subr.mxu0 0.0
    %1748 = vmatpush2.msra.mxu0 0.0
    %1749 = vmatprep.subr.mxu0 0.0
    %1750 = vmatpush2.msra.mxu0 0.0
    %1751 = vmatprep.subr.mxu0 0.0
    %1752 = vmatpush2.msra.mxu0 0.0
    %1753 = vmatprep.subr.mxu0 0.0
    %1754 = vmatpush2.msra.mxu0 0.0
    %1755 = vmatprep.subr.mxu0 0.0
    %1756 = vmatpush2.msra.mxu0 0.0
    %1757 = vmatprep.subr.mxu0 0.0
    %1758 = vmatpush2.msra.mxu0 0.0
    %1759 = vmatprep.subr.mxu0 0.0
    %1760 = vmatpush2.msra.mxu0 0.0
    %1761 = vmatprep.subr.mxu0 0.0
    %1762 = vmatpush2.msra.mxu0 0.0
    %1763 = vmatprep.subr.mxu0 0.0
    %1764 = vmatpush2.msra.mxu0 0.0
    %1765 = vmatprep.subr.mxu0 0.0
    %1766 = vmatpush2.msra.mxu0 0.0
    %1767 = vmatprep.subr.mxu0 0.0
    %1768 = vmatpush2.msra.mxu0 0.0
    %1769 = vmatprep.subr.mxu0 0.0
    %1770 = vmatpush2.msra.mxu0 0.0
    %1771 = vmatprep.mubr.f32.mxu0 0.0
    %v1772 = vand.u32 %v1118, 4294901760
    %1773 = vmatmul.mubr.f32.gmra.mxu0 %v1772
    %v1774 = vpop.f32.mrf.mxu0
    %v1775 = vadd.f32 %v1688, %v1774
    %v1776 = vpop.f32.mrf.mxu0
    %1777 = vdwg.mxu0
    %v1778 = vmax.f32 %v1775, 0.0
    %v1779 = vadd.f32 %v1778, %v1119
    %v1780 = vld [vmem:[#allocation2 + $0x80] sm:$0xff]
    %v1781 = vld [vmem:[#allocation2 + $0x88] sm:$0xff]
    %v1782 = vld [vmem:[#allocation2 + $0x90] sm:$0xff]
    %v1783 = vld [vmem:[#allocation2 + $0x98] sm:$0xff]
    %v1784 = vld [vmem:[#allocation2 + $0xa0] sm:$0xff]
    %v1785 = vld [vmem:[#allocation2 + $0xa8] sm:$0xff]
    %v1786 = vld [vmem:[#allocation2 + $0xb0] sm:$0xff]
    %v1787 = vld [vmem:[#allocation2 + $0xb8] sm:$0xff]
    %v1788 = vld [vmem:[#allocation2 + $0xc0] sm:$0xff]
    %v1789 = vld [vmem:[#allocation2 + $0xc8] sm:$0xff]
    %v1790 = vld [vmem:[#allocation2 + $0xd0] sm:$0xff]
    %v1791 = vld [vmem:[#allocation2 + $0xd8] sm:$0xff]
    %v1792 = vld [vmem:[#allocation2 + $0xe0] sm:$0xff]
    %v1793 = vld [vmem:[#allocation2 + $0xe8] sm:$0xff]
    %v1794 = vld [vmem:[#allocation2 + $0xf0] sm:$0xff]
    %v1795 = vld [vmem:[#allocation2 + $0xf8] sm:$0xff]
    %v1796 = vld [vmem:[%s4 + $0x2] ss:$0 sm:$0xff]
    %1797 = vmatprep.subr.mxu0 0.0
    %v1798 = vand.u32 %v1795, 4294901760
    %1799 = vmatpush1.msra.mxu0 %v1798
    %1800 = vmatprep.subr.mxu0 0.0
    %v1801 = vand.u32 %v1794, 4294901760
    %1802 = vmatpush1.msra.mxu0 %v1801
    %1803 = vmatprep.subr.mxu0 0.0
    %v1804 = vand.u32 %v1793, 4294901760
    %1805 = vmatpush1.msra.mxu0 %v1804
    %1806 = vmatprep.subr.mxu0 0.0
    %v1807 = vand.u32 %v1792, 4294901760
    %1808 = vmatpush1.msra.mxu0 %v1807
    %1809 = vmatprep.subr.mxu0 0.0
    %v1810 = vand.u32 %v1791, 4294901760
    %1811 = vmatpush1.msra.mxu0 %v1810
    %1812 = vmatprep.subr.mxu0 0.0
    %v1813 = vand.u32 %v1790, 4294901760
    %1814 = vmatpush1.msra.mxu0 %v1813
    %1815 = vmatprep.subr.mxu0 0.0
    %v1816 = vand.u32 %v1789, 4294901760
    %1817 = vmatpush1.msra.mxu0 %v1816
    %1818 = vmatprep.subr.mxu0 0.0
    %v1819 = vand.u32 %v1788, 4294901760
    %1820 = vmatpush1.msra.mxu0 %v1819
    %1821 = vmatprep.subr.mxu0 0.0
    %v1822 = vand.u32 %v1787, 4294901760
    %1823 = vmatpush1.msra.mxu0 %v1822
    %1824 = vmatprep.subr.mxu0 0.0
    %v1825 = vand.u32 %v1786, 4294901760
    %1826 = vmatpush1.msra.mxu0 %v1825
    %1827 = vmatprep.subr.mxu0 0.0
    %v1828 = vand.u32 %v1785, 4294901760
    %1829 = vmatpush1.msra.mxu0 %v1828
    %1830 = vmatprep.subr.mxu0 0.0
    %v1831 = vand.u32 %v1784, 4294901760
    %1832 = vmatpush1.msra.mxu0 %v1831
    %1833 = vmatprep.subr.mxu0 0.0
    %v1834 = vand.u32 %v1783, 4294901760
    %1835 = vmatpush1.msra.mxu0 %v1834
    %1836 = vmatprep.subr.mxu0 0.0
    %v1837 = vand.u32 %v1782, 4294901760
    %1838 = vmatpush1.msra.mxu0 %v1837
    %1839 = vmatprep.subr.mxu0 0.0
    %v1840 = vand.u32 %v1781, 4294901760
    %1841 = vmatpush1.msra.mxu0 %v1840
    %1842 = vmatprep.subr.mxu0 0.0
    %v1843 = vand.u32 %v1780, 4294901760
    %1844 = vmatpush1.msra.mxu0 %v1843
    %1845 = vmatprep.subr.mxu0 0.0
    %1846 = vmatpush2.msra.mxu0 0.0
    %1847 = vmatprep.subr.mxu0 0.0
    %1848 = vmatpush2.msra.mxu0 0.0
    %1849 = vmatprep.subr.mxu0 0.0
    %1850 = vmatpush2.msra.mxu0 0.0
    %1851 = vmatprep.subr.mxu0 0.0
    %1852 = vmatpush2.msra.mxu0 0.0
    %1853 = vmatprep.subr.mxu0 0.0
    %1854 = vmatpush2.msra.mxu0 0.0
    %1855 = vmatprep.subr.mxu0 0.0
    %1856 = vmatpush2.msra.mxu0 0.0
    %1857 = vmatprep.subr.mxu0 0.0
    %1858 = vmatpush2.msra.mxu0 0.0
    %1859 = vmatprep.subr.mxu0 0.0
    %1860 = vmatpush2.msra.mxu0 0.0
    %1861 = vmatprep.subr.mxu0 0.0
    %1862 = vmatpush2.msra.mxu0 0.0
    %1863 = vmatprep.subr.mxu0 0.0
    %1864 = vmatpush2.msra.mxu0 0.0
    %1865 = vmatprep.subr.mxu0 0.0
    %1866 = vmatpush2.msra.mxu0 0.0
    %1867 = vmatprep.subr.mxu0 0.0
    %1868 = vmatpush2.msra.mxu0 0.0
    %1869 = vmatprep.subr.mxu0 0.0
    %1870 = vmatpush2.msra.mxu0 0.0
    %1871 = vmatprep.subr.mxu0 0.0
    %1872 = vmatpush2.msra.mxu0 0.0
    %1873 = vmatprep.subr.mxu0 0.0
    %1874 = vmatpush2.msra.mxu0 0.0
    %1875 = vmatprep.subr.mxu0 0.0
    %1876 = vmatpush2.msra.mxu0 0.0
    %1877 = vmatprep.mubr.f32.mxu0 0.0
    %v1878 = vand.u32 %v1779, 4294901760
    %v1879 = vsub.f32 %v1779, %v1878
    %v1880 = vand.u32 %v1879, 4294901760
    %v1881 = vsub.f32 %v1879, %v1880
    %v1882 = vand.u32 %v1881, 4294901760
    %1883 = vmatmul.mubr.f32.gmra.mxu0 %v1882
    %v1884 = vpop.f32.mrf.mxu0
    %v1885 = vadd.f32 %v1796, %v1884
    %v1886 = vpop.f32.mrf.mxu0
    %1887 = vdwg.mxu0
    %1888 = vmatprep.subr.mxu0 0.0
    %v1889 = vand.u32 %v1795, 4294901760
    %v1890 = vsub.f32 %v1795, %v1889
    %v1891 = vand.u32 %v1890, 4294901760
    %v1892 = vsub.f32 %v1890, %v1891
    %v1893 = vand.u32 %v1892, 4294901760
    %1894 = vmatpush1.msra.mxu0 %v1893
    %1895 = vmatprep.subr.mxu0 0.0
    %v1896 = vand.u32 %v1794, 4294901760
    %v1897 = vsub.f32 %v1794, %v1896
    %v1898 = vand.u32 %v1897, 4294901760
    %v1899 = vsub.f32 %v1897, %v1898
    %v1900 = vand.u32 %v1899, 4294901760
    %1901 = vmatpush1.msra.mxu0 %v1900
    %1902 = vmatprep.subr.mxu0 0.0
    %v1903 = vand.u32 %v1793, 4294901760
    %v1904 = vsub.f32 %v1793, %v1903
    %v1905 = vand.u32 %v1904, 4294901760
    %v1906 = vsub.f32 %v1904, %v1905
    %v1907 = vand.u32 %v1906, 4294901760
    %1908 = vmatpush1.msra.mxu0 %v1907
    %1909 = vmatprep.subr.mxu0 0.0
    %v1910 = vand.u32 %v1792, 4294901760
    %v1911 = vsub.f32 %v1792, %v1910
    %v1912 = vand.u32 %v1911, 4294901760
    %v1913 = vsub.f32 %v1911, %v1912
    %v1914 = vand.u32 %v1913, 4294901760
    %1915 = vmatpush1.msra.mxu0 %v1914
    %1916 = vmatprep.subr.mxu0 0.0
    %v1917 = vand.u32 %v1791, 4294901760
    %v1918 = vsub.f32 %v1791, %v1917
    %v1919 = vand.u32 %v1918, 4294901760
    %v1920 = vsub.f32 %v1918, %v1919
    %v1921 = vand.u32 %v1920, 4294901760
    %1922 = vmatpush1.msra.mxu0 %v1921
    %1923 = vmatprep.subr.mxu0 0.0
    %v1924 = vand.u32 %v1790, 4294901760
    %v1925 = vsub.f32 %v1790, %v1924
    %v1926 = vand.u32 %v1925, 4294901760
    %v1927 = vsub.f32 %v1925, %v1926
    %v1928 = vand.u32 %v1927, 4294901760
    %1929 = vmatpush1.msra.mxu0 %v1928
    %1930 = vmatprep.subr.mxu0 0.0
    %v1931 = vand.u32 %v1789, 4294901760
    %v1932 = vsub.f32 %v1789, %v1931
    %v1933 = vand.u32 %v1932, 4294901760
    %v1934 = vsub.f32 %v1932, %v1933
    %v1935 = vand.u32 %v1934, 4294901760
    %1936 = vmatpush1.msra.mxu0 %v1935
    %1937 = vmatprep.subr.mxu0 0.0
    %v1938 = vand.u32 %v1788, 4294901760
    %v1939 = vsub.f32 %v1788, %v1938
    %v1940 = vand.u32 %v1939, 4294901760
    %v1941 = vsub.f32 %v1939, %v1940
    %v1942 = vand.u32 %v1941, 4294901760
    %1943 = vmatpush1.msra.mxu0 %v1942
    %1944 = vmatprep.subr.mxu0 0.0
    %v1945 = vand.u32 %v1787, 4294901760
    %v1946 = vsub.f32 %v1787, %v1945
    %v1947 = vand.u32 %v1946, 4294901760
    %v1948 = vsub.f32 %v1946, %v1947
    %v1949 = vand.u32 %v1948, 4294901760
    %1950 = vmatpush1.msra.mxu0 %v1949
    %1951 = vmatprep.subr.mxu0 0.0
    %v1952 = vand.u32 %v1786, 4294901760
    %v1953 = vsub.f32 %v1786, %v1952
    %v1954 = vand.u32 %v1953, 4294901760
    %v1955 = vsub.f32 %v1953, %v1954
    %v1956 = vand.u32 %v1955, 4294901760
    %1957 = vmatpush1.msra.mxu0 %v1956
    %1958 = vmatprep.subr.mxu0 0.0
    %v1959 = vand.u32 %v1785, 4294901760
    %v1960 = vsub.f32 %v1785, %v1959
    %v1961 = vand.u32 %v1960, 4294901760
    %v1962 = vsub.f32 %v1960, %v1961
    %v1963 = vand.u32 %v1962, 4294901760
    %1964 = vmatpush1.msra.mxu0 %v1963
    %1965 = vmatprep.subr.mxu0 0.0
    %v1966 = vand.u32 %v1784, 4294901760
    %v1967 = vsub.f32 %v1784, %v1966
    %v1968 = vand.u32 %v1967, 4294901760
    %v1969 = vsub.f32 %v1967, %v1968
    %v1970 = vand.u32 %v1969, 4294901760
    %1971 = vmatpush1.msra.mxu0 %v1970
    %1972 = vmatprep.subr.mxu0 0.0
    %v1973 = vand.u32 %v1783, 4294901760
    %v1974 = vsub.f32 %v1783, %v1973
    %v1975 = vand.u32 %v1974, 4294901760
    %v1976 = vsub.f32 %v1974, %v1975
    %v1977 = vand.u32 %v1976, 4294901760
    %1978 = vmatpush1.msra.mxu0 %v1977
    %1979 = vmatprep.subr.mxu0 0.0
    %v1980 = vand.u32 %v1782, 4294901760
    %v1981 = vsub.f32 %v1782, %v1980
    %v1982 = vand.u32 %v1981, 4294901760
    %v1983 = vsub.f32 %v1981, %v1982
    %v1984 = vand.u32 %v1983, 4294901760
    %1985 = vmatpush1.msra.mxu0 %v1984
    %1986 = vmatprep.subr.mxu0 0.0
    %v1987 = vand.u32 %v1781, 4294901760
    %v1988 = vsub.f32 %v1781, %v1987
    %v1989 = vand.u32 %v1988, 4294901760
    %v1990 = vsub.f32 %v1988, %v1989
    %v1991 = vand.u32 %v1990, 4294901760
    %1992 = vmatpush1.msra.mxu0 %v1991
    %1993 = vmatprep.subr.mxu0 0.0
    %v1994 = vand.u32 %v1780, 4294901760
    %v1995 = vsub.f32 %v1780, %v1994
    %v1996 = vand.u32 %v1995, 4294901760
    %v1997 = vsub.f32 %v1995, %v1996
    %v1998 = vand.u32 %v1997, 4294901760
    %1999 = vmatpush1.msra.mxu0 %v1998
    %2000 = vmatprep.subr.mxu0 0.0
    %2001 = vmatpush2.msra.mxu0 0.0
    %2002 = vmatprep.subr.mxu0 0.0
    %2003 = vmatpush2.msra.mxu0 0.0
    %2004 = vmatprep.subr.mxu0 0.0
    %2005 = vmatpush2.msra.mxu0 0.0
    %2006 = vmatprep.subr.mxu0 0.0
    %2007 = vmatpush2.msra.mxu0 0.0
    %2008 = vmatprep.subr.mxu0 0.0
    %2009 = vmatpush2.msra.mxu0 0.0
    %2010 = vmatprep.subr.mxu0 0.0
    %2011 = vmatpush2.msra.mxu0 0.0
    %2012 = vmatprep.subr.mxu0 0.0
    %2013 = vmatpush2.msra.mxu0 0.0
    %2014 = vmatprep.subr.mxu0 0.0
    %2015 = vmatpush2.msra.mxu0 0.0
    %2016 = vmatprep.subr.mxu0 0.0
    %2017 = vmatpush2.msra.mxu0 0.0
    %2018 = vmatprep.subr.mxu0 0.0
    %2019 = vmatpush2.msra.mxu0 0.0
    %2020 = vmatprep.subr.mxu0 0.0
    %2021 = vmatpush2.msra.mxu0 0.0
    %2022 = vmatprep.subr.mxu0 0.0
    %2023 = vmatpush2.msra.mxu0 0.0
    %2024 = vmatprep.subr.mxu0 0.0
    %2025 = vmatpush2.msra.mxu0 0.0
    %2026 = vmatprep.subr.mxu0 0.0
    %2027 = vmatpush2.msra.mxu0 0.0
    %2028 = vmatprep.subr.mxu0 0.0
    %2029 = vmatpush2.msra.mxu0 0.0
    %2030 = vmatprep.subr.mxu0 0.0
    %2031 = vmatpush2.msra.mxu0 0.0
    %2032 = vmatprep.mubr.f32.mxu0 0.0
    %v2033 = vand.u32 %v1779, 4294901760
    %2034 = vmatmul.mubr.f32.gmra.mxu0 %v2033
    %v2035 = vpop.f32.mrf.mxu0
    %v2036 = vadd.f32 %v1885, %v2035
    %v2037 = vpop.f32.mrf.mxu0
    %2038 = vdwg.mxu0
    %2039 = vmatprep.subr.mxu0 0.0
    %v2040 = vand.u32 %v1795, 4294901760
    %v2041 = vsub.f32 %v1795, %v2040
    %2042 = vmatpush1.msra.mxu0 %v2041
    %2043 = vmatprep.subr.mxu0 0.0
    %v2044 = vand.u32 %v1794, 4294901760
    %v2045 = vsub.f32 %v1794, %v2044
    %2046 = vmatpush1.msra.mxu0 %v2045
    %2047 = vmatprep.subr.mxu0 0.0
    %v2048 = vand.u32 %v1793, 4294901760
    %v2049 = vsub.f32 %v1793, %v2048
    %2050 = vmatpush1.msra.mxu0 %v2049
    %2051 = vmatprep.subr.mxu0 0.0
    %v2052 = vand.u32 %v1792, 4294901760
    %v2053 = vsub.f32 %v1792, %v2052
    %2054 = vmatpush1.msra.mxu0 %v2053
    %2055 = vmatprep.subr.mxu0 0.0
    %v2056 = vand.u32 %v1791, 4294901760
    %v2057 = vsub.f32 %v1791, %v2056
    %2058 = vmatpush1.msra.mxu0 %v2057
    %2059 = vmatprep.subr.mxu0 0.0
    %v2060 = vand.u32 %v1790, 4294901760
    %v2061 = vsub.f32 %v1790, %v2060
    %2062 = vmatpush1.msra.mxu0 %v2061
    %2063 = vmatprep.subr.mxu0 0.0
    %v2064 = vand.u32 %v1789, 4294901760
    %v2065 = vsub.f32 %v1789, %v2064
    %2066 = vmatpush1.msra.mxu0 %v2065
    %2067 = vmatprep.subr.mxu0 0.0
    %v2068 = vand.u32 %v1788, 4294901760
    %v2069 = vsub.f32 %v1788, %v2068
    %2070 = vmatpush1.msra.mxu0 %v2069
    %2071 = vmatprep.subr.mxu0 0.0
    %v2072 = vand.u32 %v1787, 4294901760
    %v2073 = vsub.f32 %v1787, %v2072
    %2074 = vmatpush1.msra.mxu0 %v2073
    %2075 = vmatprep.subr.mxu0 0.0
    %v2076 = vand.u32 %v1786, 4294901760
    %v2077 = vsub.f32 %v1786, %v2076
    %2078 = vmatpush1.msra.mxu0 %v2077
    %2079 = vmatprep.subr.mxu0 0.0
    %v2080 = vand.u32 %v1785, 4294901760
    %v2081 = vsub.f32 %v1785, %v2080
    %2082 = vmatpush1.msra.mxu0 %v2081
    %2083 = vmatprep.subr.mxu0 0.0
    %v2084 = vand.u32 %v1784, 4294901760
    %v2085 = vsub.f32 %v1784, %v2084
    %2086 = vmatpush1.msra.mxu0 %v2085
    %2087 = vmatprep.subr.mxu0 0.0
    %v2088 = vand.u32 %v1783, 4294901760
    %v2089 = vsub.f32 %v1783, %v2088
    %2090 = vmatpush1.msra.mxu0 %v2089
    %2091 = vmatprep.subr.mxu0 0.0
    %v2092 = vand.u32 %v1782, 4294901760
    %v2093 = vsub.f32 %v1782, %v2092
    %2094 = vmatpush1.msra.mxu0 %v2093
    %2095 = vmatprep.subr.mxu0 0.0
    %v2096 = vand.u32 %v1781, 4294901760
    %v2097 = vsub.f32 %v1781, %v2096
    %2098 = vmatpush1.msra.mxu0 %v2097
    %2099 = vmatprep.subr.mxu0 0.0
    %v2100 = vand.u32 %v1780, 4294901760
    %v2101 = vsub.f32 %v1780, %v2100
    %2102 = vmatpush1.msra.mxu0 %v2101
    %2103 = vmatprep.subr.mxu0 0.0
    %2104 = vmatpush2.msra.mxu0 0.0
    %2105 = vmatprep.subr.mxu0 0.0
    %2106 = vmatpush2.msra.mxu0 0.0
    %2107 = vmatprep.subr.mxu0 0.0
    %2108 = vmatpush2.msra.mxu0 0.0
    %2109 = vmatprep.subr.mxu0 0.0
    %2110 = vmatpush2.msra.mxu0 0.0
    %2111 = vmatprep.subr.mxu0 0.0
    %2112 = vmatpush2.msra.mxu0 0.0
    %2113 = vmatprep.subr.mxu0 0.0
    %2114 = vmatpush2.msra.mxu0 0.0
    %2115 = vmatprep.subr.mxu0 0.0
    %2116 = vmatpush2.msra.mxu0 0.0
    %2117 = vmatprep.subr.mxu0 0.0
    %2118 = vmatpush2.msra.mxu0 0.0
    %2119 = vmatprep.subr.mxu0 0.0
    %2120 = vmatpush2.msra.mxu0 0.0
    %2121 = vmatprep.subr.mxu0 0.0
    %2122 = vmatpush2.msra.mxu0 0.0
    %2123 = vmatprep.subr.mxu0 0.0
    %2124 = vmatpush2.msra.mxu0 0.0
    %2125 = vmatprep.subr.mxu0 0.0
    %2126 = vmatpush2.msra.mxu0 0.0
    %2127 = vmatprep.subr.mxu0 0.0
    %2128 = vmatpush2.msra.mxu0 0.0
    %2129 = vmatprep.subr.mxu0 0.0
    %2130 = vmatpush2.msra.mxu0 0.0
    %2131 = vmatprep.subr.mxu0 0.0
    %2132 = vmatpush2.msra.mxu0 0.0
    %2133 = vmatprep.subr.mxu0 0.0
    %2134 = vmatpush2.msra.mxu0 0.0
    %2135 = vmatprep.mubr.f32.mxu0 0.0
    %v2136 = vand.u32 %v1779, 4294901760
    %v2137 = vsub.f32 %v1779, %v2136
    %2138 = vmatmul.mubr.f32.gmra.mxu0 %v2137
    %v2139 = vpop.f32.mrf.mxu0
    %v2140 = vadd.f32 %v2036, %v2139
    %v2141 = vpop.f32.mrf.mxu0
    %2142 = vdwg.mxu0
    %2143 = vmatprep.subr.mxu0 0.0
    %v2144 = vand.u32 %v1795, 4294901760
    %2145 = vmatpush1.msra.mxu0 %v2144
    %2146 = vmatprep.subr.mxu0 0.0
    %v2147 = vand.u32 %v1794, 4294901760
    %2148 = vmatpush1.msra.mxu0 %v2147
    %2149 = vmatprep.subr.mxu0 0.0
    %v2150 = vand.u32 %v1793, 4294901760
    %2151 = vmatpush1.msra.mxu0 %v2150
    %2152 = vmatprep.subr.mxu0 0.0
    %v2153 = vand.u32 %v1792, 4294901760
    %2154 = vmatpush1.msra.mxu0 %v2153
    %2155 = vmatprep.subr.mxu0 0.0
    %v2156 = vand.u32 %v1791, 4294901760
    %2157 = vmatpush1.msra.mxu0 %v2156
    %2158 = vmatprep.subr.mxu0 0.0
    %v2159 = vand.u32 %v1790, 4294901760
    %2160 = vmatpush1.msra.mxu0 %v2159
    %2161 = vmatprep.subr.mxu0 0.0
    %v2162 = vand.u32 %v1789, 4294901760
    %2163 = vmatpush1.msra.mxu0 %v2162
    %2164 = vmatprep.subr.mxu0 0.0
    %v2165 = vand.u32 %v1788, 4294901760
    %2166 = vmatpush1.msra.mxu0 %v2165
    %2167 = vmatprep.subr.mxu0 0.0
    %v2168 = vand.u32 %v1787, 4294901760
    %2169 = vmatpush1.msra.mxu0 %v2168
    %2170 = vmatprep.subr.mxu0 0.0
    %v2171 = vand.u32 %v1786, 4294901760
    %2172 = vmatpush1.msra.mxu0 %v2171
    %2173 = vmatprep.subr.mxu0 0.0
    %v2174 = vand.u32 %v1785, 4294901760
    %2175 = vmatpush1.msra.mxu0 %v2174
    %2176 = vmatprep.subr.mxu0 0.0
    %v2177 = vand.u32 %v1784, 4294901760
    %2178 = vmatpush1.msra.mxu0 %v2177
    %2179 = vmatprep.subr.mxu0 0.0
    %v2180 = vand.u32 %v1783, 4294901760
    %2181 = vmatpush1.msra.mxu0 %v2180
    %2182 = vmatprep.subr.mxu0 0.0
    %v2183 = vand.u32 %v1782, 4294901760
    %2184 = vmatpush1.msra.mxu0 %v2183
    %2185 = vmatprep.subr.mxu0 0.0
    %v2186 = vand.u32 %v1781, 4294901760
    %2187 = vmatpush1.msra.mxu0 %v2186
    %2188 = vmatprep.subr.mxu0 0.0
    %v2189 = vand.u32 %v1780, 4294901760
    %2190 = vmatpush1.msra.mxu0 %v2189
    %2191 = vmatprep.subr.mxu0 0.0
    %2192 = vmatpush2.msra.mxu0 0.0
    %2193 = vmatprep.subr.mxu0 0.0
    %2194 = vmatpush2.msra.mxu0 0.0
    %2195 = vmatprep.subr.mxu0 0.0
    %2196 = vmatpush2.msra.mxu0 0.0
    %2197 = vmatprep.subr.mxu0 0.0
    %2198 = vmatpush2.msra.mxu0 0.0
    %2199 = vmatprep.subr.mxu0 0.0
    %2200 = vmatpush2.msra.mxu0 0.0
    %2201 = vmatprep.subr.mxu0 0.0
    %2202 = vmatpush2.msra.mxu0 0.0
    %2203 = vmatprep.subr.mxu0 0.0
    %2204 = vmatpush2.msra.mxu0 0.0
    %2205 = vmatprep.subr.mxu0 0.0
    %2206 = vmatpush2.msra.mxu0 0.0
    %2207 = vmatprep.subr.mxu0 0.0
    %2208 = vmatpush2.msra.mxu0 0.0
    %2209 = vmatprep.subr.mxu0 0.0
    %2210 = vmatpush2.msra.mxu0 0.0
    %2211 = vmatprep.subr.mxu0 0.0
    %2212 = vmatpush2.msra.mxu0 0.0
    %2213 = vmatprep.subr.mxu0 0.0
    %2214 = vmatpush2.msra.mxu0 0.0
    %2215 = vmatprep.subr.mxu0 0.0
    %2216 = vmatpush2.msra.mxu0 0.0
    %2217 = vmatprep.subr.mxu0 0.0
    %2218 = vmatpush2.msra.mxu0 0.0
    %2219 = vmatprep.subr.mxu0 0.0
    %2220 = vmatpush2.msra.mxu0 0.0
    %2221 = vmatprep.subr.mxu0 0.0
    %2222 = vmatpush2.msra.mxu0 0.0
    %2223 = vmatprep.mubr.f32.mxu0 0.0
    %v2224 = vand.u32 %v1779, 4294901760
    %v2225 = vsub.f32 %v1779, %v2224
    %v2226 = vand.u32 %v2225, 4294901760
    %2227 = vmatmul.mubr.f32.gmra.mxu0 %v2226
    %v2228 = vpop.f32.mrf.mxu0
    %v2229 = vadd.f32 %v2140, %v2228
    %v2230 = vpop.f32.mrf.mxu0
    %2231 = vdwg.mxu0
    %2232 = vmatprep.subr.mxu0 0.0
    %v2233 = vand.u32 %v1795, 4294901760
    %v2234 = vsub.f32 %v1795, %v2233
    %v2235 = vand.u32 %v2234, 4294901760
    %2236 = vmatpush1.msra.mxu0 %v2235
    %2237 = vmatprep.subr.mxu0 0.0
    %v2238 = vand.u32 %v1794, 4294901760
    %v2239 = vsub.f32 %v1794, %v2238
    %v2240 = vand.u32 %v2239, 4294901760
    %2241 = vmatpush1.msra.mxu0 %v2240
    %2242 = vmatprep.subr.mxu0 0.0
    %v2243 = vand.u32 %v1793, 4294901760
    %v2244 = vsub.f32 %v1793, %v2243
    %v2245 = vand.u32 %v2244, 4294901760
    %2246 = vmatpush1.msra.mxu0 %v2245
    %2247 = vmatprep.subr.mxu0 0.0
    %v2248 = vand.u32 %v1792, 4294901760
    %v2249 = vsub.f32 %v1792, %v2248
    %v2250 = vand.u32 %v2249, 4294901760
    %2251 = vmatpush1.msra.mxu0 %v2250
    %2252 = vmatprep.subr.mxu0 0.0
    %v2253 = vand.u32 %v1791, 4294901760
    %v2254 = vsub.f32 %v1791, %v2253
    %v2255 = vand.u32 %v2254, 4294901760
    %2256 = vmatpush1.msra.mxu0 %v2255
    %2257 = vmatprep.subr.mxu0 0.0
    %v2258 = vand.u32 %v1790, 4294901760
    %v2259 = vsub.f32 %v1790, %v2258
    %v2260 = vand.u32 %v2259, 4294901760
    %2261 = vmatpush1.msra.mxu0 %v2260
    %2262 = vmatprep.subr.mxu0 0.0
    %v2263 = vand.u32 %v1789, 4294901760
    %v2264 = vsub.f32 %v1789, %v2263
    %v2265 = vand.u32 %v2264, 4294901760
    %2266 = vmatpush1.msra.mxu0 %v2265
    %2267 = vmatprep.subr.mxu0 0.0
    %v2268 = vand.u32 %v1788, 4294901760
    %v2269 = vsub.f32 %v1788, %v2268
    %v2270 = vand.u32 %v2269, 4294901760
    %2271 = vmatpush1.msra.mxu0 %v2270
    %2272 = vmatprep.subr.mxu0 0.0
    %v2273 = vand.u32 %v1787, 4294901760
    %v2274 = vsub.f32 %v1787, %v2273
    %v2275 = vand.u32 %v2274, 4294901760
    %2276 = vmatpush1.msra.mxu0 %v2275
    %2277 = vmatprep.subr.mxu0 0.0
    %v2278 = vand.u32 %v1786, 4294901760
    %v2279 = vsub.f32 %v1786, %v2278
    %v2280 = vand.u32 %v2279, 4294901760
    %2281 = vmatpush1.msra.mxu0 %v2280
    %2282 = vmatprep.subr.mxu0 0.0
    %v2283 = vand.u32 %v1785, 4294901760
    %v2284 = vsub.f32 %v1785, %v2283
    %v2285 = vand.u32 %v2284, 4294901760
    %2286 = vmatpush1.msra.mxu0 %v2285
    %2287 = vmatprep.subr.mxu0 0.0
    %v2288 = vand.u32 %v1784, 4294901760
    %v2289 = vsub.f32 %v1784, %v2288
    %v2290 = vand.u32 %v2289, 4294901760
    %2291 = vmatpush1.msra.mxu0 %v2290
    %2292 = vmatprep.subr.mxu0 0.0
    %v2293 = vand.u32 %v1783, 4294901760
    %v2294 = vsub.f32 %v1783, %v2293
    %v2295 = vand.u32 %v2294, 4294901760
    %2296 = vmatpush1.msra.mxu0 %v2295
    %2297 = vmatprep.subr.mxu0 0.0
    %v2298 = vand.u32 %v1782, 4294901760
    %v2299 = vsub.f32 %v1782, %v2298
    %v2300 = vand.u32 %v2299, 4294901760
    %2301 = vmatpush1.msra.mxu0 %v2300
    %2302 = vmatprep.subr.mxu0 0.0
    %v2303 = vand.u32 %v1781, 4294901760
    %v2304 = vsub.f32 %v1781, %v2303
    %v2305 = vand.u32 %v2304, 4294901760
    %2306 = vmatpush1.msra.mxu0 %v2305
    %2307 = vmatprep.subr.mxu0 0.0
    %v2308 = vand.u32 %v1780, 4294901760
    %v2309 = vsub.f32 %v1780, %v2308
    %v2310 = vand.u32 %v2309, 4294901760
    %2311 = vmatpush1.msra.mxu0 %v2310
    %2312 = vmatprep.subr.mxu0 0.0
    %2313 = vmatpush2.msra.mxu0 0.0
    %2314 = vmatprep.subr.mxu0 0.0
    %2315 = vmatpush2.msra.mxu0 0.0
    %2316 = vmatprep.subr.mxu0 0.0
    %2317 = vmatpush2.msra.mxu0 0.0
    %2318 = vmatprep.subr.mxu0 0.0
    %2319 = vmatpush2.msra.mxu0 0.0
    %2320 = vmatprep.subr.mxu0 0.0
    %2321 = vmatpush2.msra.mxu0 0.0
    %2322 = vmatprep.subr.mxu0 0.0
    %2323 = vmatpush2.msra.mxu0 0.0
    %2324 = vmatprep.subr.mxu0 0.0
    %2325 = vmatpush2.msra.mxu0 0.0
    %2326 = vmatprep.subr.mxu0 0.0
    %2327 = vmatpush2.msra.mxu0 0.0
    %2328 = vmatprep.subr.mxu0 0.0
    %2329 = vmatpush2.msra.mxu0 0.0
    %2330 = vmatprep.subr.mxu0 0.0
    %2331 = vmatpush2.msra.mxu0 0.0
    %2332 = vmatprep.subr.mxu0 0.0
    %2333 = vmatpush2.msra.mxu0 0.0
    %2334 = vmatprep.subr.mxu0 0.0
    %2335 = vmatpush2.msra.mxu0 0.0
    %2336 = vmatprep.subr.mxu0 0.0
    %2337 = vmatpush2.msra.mxu0 0.0
    %2338 = vmatprep.subr.mxu0 0.0
    %2339 = vmatpush2.msra.mxu0 0.0
    %2340 = vmatprep.subr.mxu0 0.0
    %2341 = vmatpush2.msra.mxu0 0.0
    %2342 = vmatprep.subr.mxu0 0.0
    %2343 = vmatpush2.msra.mxu0 0.0
    %2344 = vmatprep.mubr.f32.mxu0 0.0
    %v2345 = vand.u32 %v1779, 4294901760
    %2346 = vmatmul.mubr.f32.gmra.mxu0 %v2345
    %v2347 = vpop.f32.mrf.mxu0
    %v2348 = vadd.f32 %v2229, %v2347
    %v2349 = vpop.f32.mrf.mxu0
    %2350 = vdwg.mxu0
    %2351 = vmatprep.subr.mxu0 0.0
    %v2352 = vand.u32 %v1795, 4294901760
    %2353 = vmatpush1.msra.mxu0 %v2352
    %2354 = vmatprep.subr.mxu0 0.0
    %v2355 = vand.u32 %v1794, 4294901760
    %2356 = vmatpush1.msra.mxu0 %v2355
    %2357 = vmatprep.subr.mxu0 0.0
    %v2358 = vand.u32 %v1793, 4294901760
    %2359 = vmatpush1.msra.mxu0 %v2358
    %2360 = vmatprep.subr.mxu0 0.0
    %v2361 = vand.u32 %v1792, 4294901760
    %2362 = vmatpush1.msra.mxu0 %v2361
    %2363 = vmatprep.subr.mxu0 0.0
    %v2364 = vand.u32 %v1791, 4294901760
    %2365 = vmatpush1.msra.mxu0 %v2364
    %2366 = vmatprep.subr.mxu0 0.0
    %v2367 = vand.u32 %v1790, 4294901760
    %2368 = vmatpush1.msra.mxu0 %v2367
    %2369 = vmatprep.subr.mxu0 0.0
    %v2370 = vand.u32 %v1789, 4294901760
    %2371 = vmatpush1.msra.mxu0 %v2370
    %2372 = vmatprep.subr.mxu0 0.0
    %v2373 = vand.u32 %v1788, 4294901760
    %2374 = vmatpush1.msra.mxu0 %v2373
    %2375 = vmatprep.subr.mxu0 0.0
    %v2376 = vand.u32 %v1787, 4294901760
    %2377 = vmatpush1.msra.mxu0 %v2376
    %2378 = vmatprep.subr.mxu0 0.0
    %v2379 = vand.u32 %v1786, 4294901760
    %2380 = vmatpush1.msra.mxu0 %v2379
    %2381 = vmatprep.subr.mxu0 0.0
    %v2382 = vand.u32 %v1785, 4294901760
    %2383 = vmatpush1.msra.mxu0 %v2382
    %2384 = vmatprep.subr.mxu0 0.0
    %v2385 = vand.u32 %v1784, 4294901760
    %2386 = vmatpush1.msra.mxu0 %v2385
    %2387 = vmatprep.subr.mxu0 0.0
    %v2388 = vand.u32 %v1783, 4294901760
    %2389 = vmatpush1.msra.mxu0 %v2388
    %2390 = vmatprep.subr.mxu0 0.0
    %v2391 = vand.u32 %v1782, 4294901760
    %2392 = vmatpush1.msra.mxu0 %v2391
    %2393 = vmatprep.subr.mxu0 0.0
    %v2394 = vand.u32 %v1781, 4294901760
    %2395 = vmatpush1.msra.mxu0 %v2394
    %2396 = vmatprep.subr.mxu0 0.0
    %v2397 = vand.u32 %v1780, 4294901760
    %2398 = vmatpush1.msra.mxu0 %v2397
    %2399 = vmatprep.subr.mxu0 0.0
    %2400 = vmatpush2.msra.mxu0 0.0
    %2401 = vmatprep.subr.mxu0 0.0
    %2402 = vmatpush2.msra.mxu0 0.0
    %2403 = vmatprep.subr.mxu0 0.0
    %2404 = vmatpush2.msra.mxu0 0.0
    %2405 = vmatprep.subr.mxu0 0.0
    %2406 = vmatpush2.msra.mxu0 0.0
    %2407 = vmatprep.subr.mxu0 0.0
    %2408 = vmatpush2.msra.mxu0 0.0
    %2409 = vmatprep.subr.mxu0 0.0
    %2410 = vmatpush2.msra.mxu0 0.0
    %2411 = vmatprep.subr.mxu0 0.0
    %2412 = vmatpush2.msra.mxu0 0.0
    %2413 = vmatprep.subr.mxu0 0.0
    %2414 = vmatpush2.msra.mxu0 0.0
    %2415 = vmatprep.subr.mxu0 0.0
    %2416 = vmatpush2.msra.mxu0 0.0
    %2417 = vmatprep.subr.mxu0 0.0
    %2418 = vmatpush2.msra.mxu0 0.0
    %2419 = vmatprep.subr.mxu0 0.0
    %2420 = vmatpush2.msra.mxu0 0.0
    %2421 = vmatprep.subr.mxu0 0.0
    %2422 = vmatpush2.msra.mxu0 0.0
    %2423 = vmatprep.subr.mxu0 0.0
    %2424 = vmatpush2.msra.mxu0 0.0
    %2425 = vmatprep.subr.mxu0 0.0
    %2426 = vmatpush2.msra.mxu0 0.0
    %2427 = vmatprep.subr.mxu0 0.0
    %2428 = vmatpush2.msra.mxu0 0.0
    %2429 = vmatprep.subr.mxu0 0.0
    %2430 = vmatpush2.msra.mxu0 0.0
    %2431 = vmatprep.mubr.f32.mxu0 0.0
    %v2432 = vand.u32 %v1779, 4294901760
    %2433 = vmatmul.mubr.f32.gmra.mxu0 %v2432
    %v2434 = vpop.f32.mrf.mxu0
    %v2435 = vadd.f32 %v2348, %v2434
    %v2436 = vpop.f32.mrf.mxu0
    %2437 = vdwg.mxu0
    %v2438 = vmax.f32 %v2435, 0.0
    %v2439 = vld [vmem:[#allocation2 + $0x100] sm:$0xff]
    %v2440 = vld [vmem:[#allocation2 + $0x108] sm:$0xff]
    %v2441 = vld [vmem:[#allocation2 + $0x110] sm:$0xff]
    %v2442 = vld [vmem:[#allocation2 + $0x118] sm:$0xff]
    %v2443 = vld [vmem:[#allocation2 + $0x120] sm:$0xff]
    %v2444 = vld [vmem:[#allocation2 + $0x128] sm:$0xff]
    %v2445 = vld [vmem:[#allocation2 + $0x130] sm:$0xff]
    %v2446 = vld [vmem:[#allocation2 + $0x138] sm:$0xff]
    %v2447 = vld [vmem:[#allocation2 + $0x140] sm:$0xff]
    %v2448 = vld [vmem:[#allocation2 + $0x148] sm:$0xff]
    %v2449 = vld [vmem:[#allocation2 + $0x150] sm:$0xff]
    %v2450 = vld [vmem:[#allocation2 + $0x158] sm:$0xff]
    %v2451 = vld [vmem:[#allocation2 + $0x160] sm:$0xff]
    %v2452 = vld [vmem:[#allocation2 + $0x168] sm:$0xff]
    %v2453 = vld [vmem:[#allocation2 + $0x170] sm:$0xff]
    %v2454 = vld [vmem:[#allocation2 + $0x178] sm:$0xff]
    %v2455 = vld [vmem:[%s4 + $0x3] ss:$0 sm:$0xff]
    %2456 = vmatprep.subr.mxu0 0.0
    %v2457 = vand.u32 %v2454, 4294901760
    %2458 = vmatpush1.msra.mxu0 %v2457
    %2459 = vmatprep.subr.mxu0 0.0
    %v2460 = vand.u32 %v2453, 4294901760
    %2461 = vmatpush1.msra.mxu0 %v2460
    %2462 = vmatprep.subr.mxu0 0.0
    %v2463 = vand.u32 %v2452, 4294901760
    %2464 = vmatpush1.msra.mxu0 %v2463
    %2465 = vmatprep.subr.mxu0 0.0
    %v2466 = vand.u32 %v2451, 4294901760
    %2467 = vmatpush1.msra.mxu0 %v2466
    %2468 = vmatprep.subr.mxu0 0.0
    %v2469 = vand.u32 %v2450, 4294901760
    %2470 = vmatpush1.msra.mxu0 %v2469
    %2471 = vmatprep.subr.mxu0 0.0
    %v2472 = vand.u32 %v2449, 4294901760
    %2473 = vmatpush1.msra.mxu0 %v2472
    %2474 = vmatprep.subr.mxu0 0.0
    %v2475 = vand.u32 %v2448, 4294901760
    %2476 = vmatpush1.msra.mxu0 %v2475
    %2477 = vmatprep.subr.mxu0 0.0
    %v2478 = vand.u32 %v2447, 4294901760
    %2479 = vmatpush1.msra.mxu0 %v2478
    %2480 = vmatprep.subr.mxu0 0.0
    %v2481 = vand.u32 %v2446, 4294901760
    %2482 = vmatpush1.msra.mxu0 %v2481
    %2483 = vmatprep.subr.mxu0 0.0
    %v2484 = vand.u32 %v2445, 4294901760
    %2485 = vmatpush1.msra.mxu0 %v2484
    %2486 = vmatprep.subr.mxu0 0.0
    %v2487 = vand.u32 %v2444, 4294901760
    %2488 = vmatpush1.msra.mxu0 %v2487
    %2489 = vmatprep.subr.mxu0 0.0
    %v2490 = vand.u32 %v2443, 4294901760
    %2491 = vmatpush1.msra.mxu0 %v2490
    %2492 = vmatprep.subr.mxu0 0.0
    %v2493 = vand.u32 %v2442, 4294901760
    %2494 = vmatpush1.msra.mxu0 %v2493
    %2495 = vmatprep.subr.mxu0 0.0
    %v2496 = vand.u32 %v2441, 4294901760
    %2497 = vmatpush1.msra.mxu0 %v2496
    %2498 = vmatprep.subr.mxu0 0.0
    %v2499 = vand.u32 %v2440, 4294901760
    %2500 = vmatpush1.msra.mxu0 %v2499
    %2501 = vmatprep.subr.mxu0 0.0
    %v2502 = vand.u32 %v2439, 4294901760
    %2503 = vmatpush1.msra.mxu0 %v2502
    %2504 = vmatprep.subr.mxu0 0.0
    %2505 = vmatpush2.msra.mxu0 0.0
    %2506 = vmatprep.subr.mxu0 0.0
    %2507 = vmatpush2.msra.mxu0 0.0
    %2508 = vmatprep.subr.mxu0 0.0
    %2509 = vmatpush2.msra.mxu0 0.0
    %2510 = vmatprep.subr.mxu0 0.0
    %2511 = vmatpush2.msra.mxu0 0.0
    %2512 = vmatprep.subr.mxu0 0.0
    %2513 = vmatpush2.msra.mxu0 0.0
    %2514 = vmatprep.subr.mxu0 0.0
    %2515 = vmatpush2.msra.mxu0 0.0
    %2516 = vmatprep.subr.mxu0 0.0
    %2517 = vmatpush2.msra.mxu0 0.0
    %2518 = vmatprep.subr.mxu0 0.0
    %2519 = vmatpush2.msra.mxu0 0.0
    %2520 = vmatprep.subr.mxu0 0.0
    %2521 = vmatpush2.msra.mxu0 0.0
    %2522 = vmatprep.subr.mxu0 0.0
    %2523 = vmatpush2.msra.mxu0 0.0
    %2524 = vmatprep.subr.mxu0 0.0
    %2525 = vmatpush2.msra.mxu0 0.0
    %2526 = vmatprep.subr.mxu0 0.0
    %2527 = vmatpush2.msra.mxu0 0.0
    %2528 = vmatprep.subr.mxu0 0.0
    %2529 = vmatpush2.msra.mxu0 0.0
    %2530 = vmatprep.subr.mxu0 0.0
    %2531 = vmatpush2.msra.mxu0 0.0
    %2532 = vmatprep.subr.mxu0 0.0
    %2533 = vmatpush2.msra.mxu0 0.0
    %2534 = vmatprep.subr.mxu0 0.0
    %2535 = vmatpush2.msra.mxu0 0.0
    %2536 = vmatprep.mubr.f32.mxu0 0.0
    %v2537 = vand.u32 %v2438, 4294901760
    %v2538 = vsub.f32 %v2438, %v2537
    %v2539 = vand.u32 %v2538, 4294901760
    %v2540 = vsub.f32 %v2538, %v2539
    %v2541 = vand.u32 %v2540, 4294901760
    %2542 = vmatmul.mubr.f32.gmra.mxu0 %v2541
    %v2543 = vpop.f32.mrf.mxu0
    %v2544 = vadd.f32 %v2455, %v2543
    %v2545 = vpop.f32.mrf.mxu0
    %2546 = vdwg.mxu0
    %2547 = vmatprep.subr.mxu0 0.0
    %v2548 = vand.u32 %v2454, 4294901760
    %v2549 = vsub.f32 %v2454, %v2548
    %v2550 = vand.u32 %v2549, 4294901760
    %v2551 = vsub.f32 %v2549, %v2550
    %v2552 = vand.u32 %v2551, 4294901760
    %2553 = vmatpush1.msra.mxu0 %v2552
    %2554 = vmatprep.subr.mxu0 0.0
    %v2555 = vand.u32 %v2453, 4294901760
    %v2556 = vsub.f32 %v2453, %v2555
    %v2557 = vand.u32 %v2556, 4294901760
    %v2558 = vsub.f32 %v2556, %v2557
    %v2559 = vand.u32 %v2558, 4294901760
    %2560 = vmatpush1.msra.mxu0 %v2559
    %2561 = vmatprep.subr.mxu0 0.0
    %v2562 = vand.u32 %v2452, 4294901760
    %v2563 = vsub.f32 %v2452, %v2562
    %v2564 = vand.u32 %v2563, 4294901760
    %v2565 = vsub.f32 %v2563, %v2564
    %v2566 = vand.u32 %v2565, 4294901760
    %2567 = vmatpush1.msra.mxu0 %v2566
    %2568 = vmatprep.subr.mxu0 0.0
    %v2569 = vand.u32 %v2451, 4294901760
    %v2570 = vsub.f32 %v2451, %v2569
    %v2571 = vand.u32 %v2570, 4294901760
    %v2572 = vsub.f32 %v2570, %v2571
    %v2573 = vand.u32 %v2572, 4294901760
    %2574 = vmatpush1.msra.mxu0 %v2573
    %2575 = vmatprep.subr.mxu0 0.0
    %v2576 = vand.u32 %v2450, 4294901760
    %v2577 = vsub.f32 %v2450, %v2576
    %v2578 = vand.u32 %v2577, 4294901760
    %v2579 = vsub.f32 %v2577, %v2578
    %v2580 = vand.u32 %v2579, 4294901760
    %2581 = vmatpush1.msra.mxu0 %v2580
    %2582 = vmatprep.subr.mxu0 0.0
    %v2583 = vand.u32 %v2449, 4294901760
    %v2584 = vsub.f32 %v2449, %v2583
    %v2585 = vand.u32 %v2584, 4294901760
    %v2586 = vsub.f32 %v2584, %v2585
    %v2587 = vand.u32 %v2586, 4294901760
    %2588 = vmatpush1.msra.mxu0 %v2587
    %2589 = vmatprep.subr.mxu0 0.0
    %v2590 = vand.u32 %v2448, 4294901760
    %v2591 = vsub.f32 %v2448, %v2590
    %v2592 = vand.u32 %v2591, 4294901760
    %v2593 = vsub.f32 %v2591, %v2592
    %v2594 = vand.u32 %v2593, 4294901760
    %2595 = vmatpush1.msra.mxu0 %v2594
    %2596 = vmatprep.subr.mxu0 0.0
    %v2597 = vand.u32 %v2447, 4294901760
    %v2598 = vsub.f32 %v2447, %v2597
    %v2599 = vand.u32 %v2598, 4294901760
    %v2600 = vsub.f32 %v2598, %v2599
    %v2601 = vand.u32 %v2600, 4294901760
    %2602 = vmatpush1.msra.mxu0 %v2601
    %2603 = vmatprep.subr.mxu0 0.0
    %v2604 = vand.u32 %v2446, 4294901760
    %v2605 = vsub.f32 %v2446, %v2604
    %v2606 = vand.u32 %v2605, 4294901760
    %v2607 = vsub.f32 %v2605, %v2606
    %v2608 = vand.u32 %v2607, 4294901760
    %2609 = vmatpush1.msra.mxu0 %v2608
    %2610 = vmatprep.subr.mxu0 0.0
    %v2611 = vand.u32 %v2445, 4294901760
    %v2612 = vsub.f32 %v2445, %v2611
    %v2613 = vand.u32 %v2612, 4294901760
    %v2614 = vsub.f32 %v2612, %v2613
    %v2615 = vand.u32 %v2614, 4294901760
    %2616 = vmatpush1.msra.mxu0 %v2615
    %2617 = vmatprep.subr.mxu0 0.0
    %v2618 = vand.u32 %v2444, 4294901760
    %v2619 = vsub.f32 %v2444, %v2618
    %v2620 = vand.u32 %v2619, 4294901760
    %v2621 = vsub.f32 %v2619, %v2620
    %v2622 = vand.u32 %v2621, 4294901760
    %2623 = vmatpush1.msra.mxu0 %v2622
    %2624 = vmatprep.subr.mxu0 0.0
    %v2625 = vand.u32 %v2443, 4294901760
    %v2626 = vsub.f32 %v2443, %v2625
    %v2627 = vand.u32 %v2626, 4294901760
    %v2628 = vsub.f32 %v2626, %v2627
    %v2629 = vand.u32 %v2628, 4294901760
    %2630 = vmatpush1.msra.mxu0 %v2629
    %2631 = vmatprep.subr.mxu0 0.0
    %v2632 = vand.u32 %v2442, 4294901760
    %v2633 = vsub.f32 %v2442, %v2632
    %v2634 = vand.u32 %v2633, 4294901760
    %v2635 = vsub.f32 %v2633, %v2634
    %v2636 = vand.u32 %v2635, 4294901760
    %2637 = vmatpush1.msra.mxu0 %v2636
    %2638 = vmatprep.subr.mxu0 0.0
    %v2639 = vand.u32 %v2441, 4294901760
    %v2640 = vsub.f32 %v2441, %v2639
    %v2641 = vand.u32 %v2640, 4294901760
    %v2642 = vsub.f32 %v2640, %v2641
    %v2643 = vand.u32 %v2642, 4294901760
    %2644 = vmatpush1.msra.mxu0 %v2643
    %2645 = vmatprep.subr.mxu0 0.0
    %v2646 = vand.u32 %v2440, 4294901760
    %v2647 = vsub.f32 %v2440, %v2646
    %v2648 = vand.u32 %v2647, 4294901760
    %v2649 = vsub.f32 %v2647, %v2648
    %v2650 = vand.u32 %v2649, 4294901760
    %2651 = vmatpush1.msra.mxu0 %v2650
    %2652 = vmatprep.subr.mxu0 0.0
    %v2653 = vand.u32 %v2439, 4294901760
    %v2654 = vsub.f32 %v2439, %v2653
    %v2655 = vand.u32 %v2654, 4294901760
    %v2656 = vsub.f32 %v2654, %v2655
    %v2657 = vand.u32 %v2656, 4294901760
    %2658 = vmatpush1.msra.mxu0 %v2657
    %2659 = vmatprep.subr.mxu0 0.0
    %2660 = vmatpush2.msra.mxu0 0.0
    %2661 = vmatprep.subr.mxu0 0.0
    %2662 = vmatpush2.msra.mxu0 0.0
    %2663 = vmatprep.subr.mxu0 0.0
    %2664 = vmatpush2.msra.mxu0 0.0
    %2665 = vmatprep.subr.mxu0 0.0
    %2666 = vmatpush2.msra.mxu0 0.0
    %2667 = vmatprep.subr.mxu0 0.0
    %2668 = vmatpush2.msra.mxu0 0.0
    %2669 = vmatprep.subr.mxu0 0.0
    %2670 = vmatpush2.msra.mxu0 0.0
    %2671 = vmatprep.subr.mxu0 0.0
    %2672 = vmatpush2.msra.mxu0 0.0
    %2673 = vmatprep.subr.mxu0 0.0
    %2674 = vmatpush2.msra.mxu0 0.0
    %2675 = vmatprep.subr.mxu0 0.0
    %2676 = vmatpush2.msra.mxu0 0.0
    %2677 = vmatprep.subr.mxu0 0.0
    %2678 = vmatpush2.msra.mxu0 0.0
    %2679 = vmatprep.subr.mxu0 0.0
    %2680 = vmatpush2.msra.mxu0 0.0
    %2681 = vmatprep.subr.mxu0 0.0
    %2682 = vmatpush2.msra.mxu0 0.0
    %2683 = vmatprep.subr.mxu0 0.0
    %2684 = vmatpush2.msra.mxu0 0.0
    %2685 = vmatprep.subr.mxu0 0.0
    %2686 = vmatpush2.msra.mxu0 0.0
    %2687 = vmatprep.subr.mxu0 0.0
    %2688 = vmatpush2.msra.mxu0 0.0
    %2689 = vmatprep.subr.mxu0 0.0
    %2690 = vmatpush2.msra.mxu0 0.0
    %2691 = vmatprep.mubr.f32.mxu0 0.0
    %v2692 = vand.u32 %v2438, 4294901760
    %2693 = vmatmul.mubr.f32.gmra.mxu0 %v2692
    %v2694 = vpop.f32.mrf.mxu0
    %v2695 = vadd.f32 %v2544, %v2694
    %v2696 = vpop.f32.mrf.mxu0
    %2697 = vdwg.mxu0
    %2698 = vmatprep.subr.mxu0 0.0
    %v2699 = vand.u32 %v2454, 4294901760
    %v2700 = vsub.f32 %v2454, %v2699
    %2701 = vmatpush1.msra.mxu0 %v2700
    %2702 = vmatprep.subr.mxu0 0.0
    %v2703 = vand.u32 %v2453, 4294901760
    %v2704 = vsub.f32 %v2453, %v2703
    %2705 = vmatpush1.msra.mxu0 %v2704
    %2706 = vmatprep.subr.mxu0 0.0
    %v2707 = vand.u32 %v2452, 4294901760
    %v2708 = vsub.f32 %v2452, %v2707
    %2709 = vmatpush1.msra.mxu0 %v2708
    %2710 = vmatprep.subr.mxu0 0.0
    %v2711 = vand.u32 %v2451, 4294901760
    %v2712 = vsub.f32 %v2451, %v2711
    %2713 = vmatpush1.msra.mxu0 %v2712
    %2714 = vmatprep.subr.mxu0 0.0
    %v2715 = vand.u32 %v2450, 4294901760
    %v2716 = vsub.f32 %v2450, %v2715
    %2717 = vmatpush1.msra.mxu0 %v2716
    %2718 = vmatprep.subr.mxu0 0.0
    %v2719 = vand.u32 %v2449, 4294901760
    %v2720 = vsub.f32 %v2449, %v2719
    %2721 = vmatpush1.msra.mxu0 %v2720
    %2722 = vmatprep.subr.mxu0 0.0
    %v2723 = vand.u32 %v2448, 4294901760
    %v2724 = vsub.f32 %v2448, %v2723
    %2725 = vmatpush1.msra.mxu0 %v2724
    %2726 = vmatprep.subr.mxu0 0.0
    %v2727 = vand.u32 %v2447, 4294901760
    %v2728 = vsub.f32 %v2447, %v2727
    %2729 = vmatpush1.msra.mxu0 %v2728
    %2730 = vmatprep.subr.mxu0 0.0
    %v2731 = vand.u32 %v2446, 4294901760
    %v2732 = vsub.f32 %v2446, %v2731
    %2733 = vmatpush1.msra.mxu0 %v2732
    %2734 = vmatprep.subr.mxu0 0.0
    %v2735 = vand.u32 %v2445, 4294901760
    %v2736 = vsub.f32 %v2445, %v2735
    %2737 = vmatpush1.msra.mxu0 %v2736
    %2738 = vmatprep.subr.mxu0 0.0
    %v2739 = vand.u32 %v2444, 4294901760
    %v2740 = vsub.f32 %v2444, %v2739
    %2741 = vmatpush1.msra.mxu0 %v2740
    %2742 = vmatprep.subr.mxu0 0.0
    %v2743 = vand.u32 %v2443, 4294901760
    %v2744 = vsub.f32 %v2443, %v2743
    %2745 = vmatpush1.msra.mxu0 %v2744
    %2746 = vmatprep.subr.mxu0 0.0
    %v2747 = vand.u32 %v2442, 4294901760
    %v2748 = vsub.f32 %v2442, %v2747
    %2749 = vmatpush1.msra.mxu0 %v2748
    %2750 = vmatprep.subr.mxu0 0.0
    %v2751 = vand.u32 %v2441, 4294901760
    %v2752 = vsub.f32 %v2441, %v2751
    %2753 = vmatpush1.msra.mxu0 %v2752
    %2754 = vmatprep.subr.mxu0 0.0
    %v2755 = vand.u32 %v2440, 4294901760
    %v2756 = vsub.f32 %v2440, %v2755
    %2757 = vmatpush1.msra.mxu0 %v2756
    %2758 = vmatprep.subr.mxu0 0.0
    %v2759 = vand.u32 %v2439, 4294901760
    %v2760 = vsub.f32 %v2439, %v2759
    %2761 = vmatpush1.msra.mxu0 %v2760
    %2762 = vmatprep.subr.mxu0 0.0
    %2763 = vmatpush2.msra.mxu0 0.0
    %2764 = vmatprep.subr.mxu0 0.0
    %2765 = vmatpush2.msra.mxu0 0.0
    %2766 = vmatprep.subr.mxu0 0.0
    %2767 = vmatpush2.msra.mxu0 0.0
    %2768 = vmatprep.subr.mxu0 0.0
    %2769 = vmatpush2.msra.mxu0 0.0
    %2770 = vmatprep.subr.mxu0 0.0
    %2771 = vmatpush2.msra.mxu0 0.0
    %2772 = vmatprep.subr.mxu0 0.0
    %2773 = vmatpush2.msra.mxu0 0.0
    %2774 = vmatprep.subr.mxu0 0.0
    %2775 = vmatpush2.msra.mxu0 0.0
    %2776 = vmatprep.subr.mxu0 0.0
    %2777 = vmatpush2.msra.mxu0 0.0
    %2778 = vmatprep.subr.mxu0 0.0
    %2779 = vmatpush2.msra.mxu0 0.0
    %2780 = vmatprep.subr.mxu0 0.0
    %2781 = vmatpush2.msra.mxu0 0.0
    %2782 = vmatprep.subr.mxu0 0.0
    %2783 = vmatpush2.msra.mxu0 0.0
    %2784 = vmatprep.subr.mxu0 0.0
    %2785 = vmatpush2.msra.mxu0 0.0
    %2786 = vmatprep.subr.mxu0 0.0
    %2787 = vmatpush2.msra.mxu0 0.0
    %2788 = vmatprep.subr.mxu0 0.0
    %2789 = vmatpush2.msra.mxu0 0.0
    %2790 = vmatprep.subr.mxu0 0.0
    %2791 = vmatpush2.msra.mxu0 0.0
    %2792 = vmatprep.subr.mxu0 0.0
    %2793 = vmatpush2.msra.mxu0 0.0
    %2794 = vmatprep.mubr.f32.mxu0 0.0
    %v2795 = vand.u32 %v2438, 4294901760
    %v2796 = vsub.f32 %v2438, %v2795
    %2797 = vmatmul.mubr.f32.gmra.mxu0 %v2796
    %v2798 = vpop.f32.mrf.mxu0
    %v2799 = vadd.f32 %v2695, %v2798
    %v2800 = vpop.f32.mrf.mxu0
    %2801 = vdwg.mxu0
    %2802 = vmatprep.subr.mxu0 0.0
    %v2803 = vand.u32 %v2454, 4294901760
    %2804 = vmatpush1.msra.mxu0 %v2803
    %2805 = vmatprep.subr.mxu0 0.0
    %v2806 = vand.u32 %v2453, 4294901760
    %2807 = vmatpush1.msra.mxu0 %v2806
    %2808 = vmatprep.subr.mxu0 0.0
    %v2809 = vand.u32 %v2452, 4294901760
    %2810 = vmatpush1.msra.mxu0 %v2809
    %2811 = vmatprep.subr.mxu0 0.0
    %v2812 = vand.u32 %v2451, 4294901760
    %2813 = vmatpush1.msra.mxu0 %v2812
    %2814 = vmatprep.subr.mxu0 0.0
    %v2815 = vand.u32 %v2450, 4294901760
    %2816 = vmatpush1.msra.mxu0 %v2815
    %2817 = vmatprep.subr.mxu0 0.0
    %v2818 = vand.u32 %v2449, 4294901760
    %2819 = vmatpush1.msra.mxu0 %v2818
    %2820 = vmatprep.subr.mxu0 0.0
    %v2821 = vand.u32 %v2448, 4294901760
    %2822 = vmatpush1.msra.mxu0 %v2821
    %2823 = vmatprep.subr.mxu0 0.0
    %v2824 = vand.u32 %v2447, 4294901760
    %2825 = vmatpush1.msra.mxu0 %v2824
    %2826 = vmatprep.subr.mxu0 0.0
    %v2827 = vand.u32 %v2446, 4294901760
    %2828 = vmatpush1.msra.mxu0 %v2827
    %2829 = vmatprep.subr.mxu0 0.0
    %v2830 = vand.u32 %v2445, 4294901760
    %2831 = vmatpush1.msra.mxu0 %v2830
    %2832 = vmatprep.subr.mxu0 0.0
    %v2833 = vand.u32 %v2444, 4294901760
    %2834 = vmatpush1.msra.mxu0 %v2833
    %2835 = vmatprep.subr.mxu0 0.0
    %v2836 = vand.u32 %v2443, 4294901760
    %2837 = vmatpush1.msra.mxu0 %v2836
    %2838 = vmatprep.subr.mxu0 0.0
    %v2839 = vand.u32 %v2442, 4294901760
    %2840 = vmatpush1.msra.mxu0 %v2839
    %2841 = vmatprep.subr.mxu0 0.0
    %v2842 = vand.u32 %v2441, 4294901760
    %2843 = vmatpush1.msra.mxu0 %v2842
    %2844 = vmatprep.subr.mxu0 0.0
    %v2845 = vand.u32 %v2440, 4294901760
    %2846 = vmatpush1.msra.mxu0 %v2845
    %2847 = vmatprep.subr.mxu0 0.0
    %v2848 = vand.u32 %v2439, 4294901760
    %2849 = vmatpush1.msra.mxu0 %v2848
    %2850 = vmatprep.subr.mxu0 0.0
    %2851 = vmatpush2.msra.mxu0 0.0
    %2852 = vmatprep.subr.mxu0 0.0
    %2853 = vmatpush2.msra.mxu0 0.0
    %2854 = vmatprep.subr.mxu0 0.0
    %2855 = vmatpush2.msra.mxu0 0.0
    %2856 = vmatprep.subr.mxu0 0.0
    %2857 = vmatpush2.msra.mxu0 0.0
    %2858 = vmatprep.subr.mxu0 0.0
    %2859 = vmatpush2.msra.mxu0 0.0
    %2860 = vmatprep.subr.mxu0 0.0
    %2861 = vmatpush2.msra.mxu0 0.0
    %2862 = vmatprep.subr.mxu0 0.0
    %2863 = vmatpush2.msra.mxu0 0.0
    %2864 = vmatprep.subr.mxu0 0.0
    %2865 = vmatpush2.msra.mxu0 0.0
    %2866 = vmatprep.subr.mxu0 0.0
    %2867 = vmatpush2.msra.mxu0 0.0
    %2868 = vmatprep.subr.mxu0 0.0
    %2869 = vmatpush2.msra.mxu0 0.0
    %2870 = vmatprep.subr.mxu0 0.0
    %2871 = vmatpush2.msra.mxu0 0.0
    %2872 = vmatprep.subr.mxu0 0.0
    %2873 = vmatpush2.msra.mxu0 0.0
    %2874 = vmatprep.subr.mxu0 0.0
    %2875 = vmatpush2.msra.mxu0 0.0
    %2876 = vmatprep.subr.mxu0 0.0
    %2877 = vmatpush2.msra.mxu0 0.0
    %2878 = vmatprep.subr.mxu0 0.0
    %2879 = vmatpush2.msra.mxu0 0.0
    %2880 = vmatprep.subr.mxu0 0.0
    %2881 = vmatpush2.msra.mxu0 0.0
    %2882 = vmatprep.mubr.f32.mxu0 0.0
    %v2883 = vand.u32 %v2438, 4294901760
    %v2884 = vsub.f32 %v2438, %v2883
    %v2885 = vand.u32 %v2884, 4294901760
    %2886 = vmatmul.mubr.f32.gmra.mxu0 %v2885
    %v2887 = vpop.f32.mrf.mxu0
    %v2888 = vadd.f32 %v2799, %v2887
    %v2889 = vpop.f32.mrf.mxu0
    %2890 = vdwg.mxu0
    %2891 = vmatprep.subr.mxu0 0.0
    %v2892 = vand.u32 %v2454, 4294901760
    %v2893 = vsub.f32 %v2454, %v2892
    %v2894 = vand.u32 %v2893, 4294901760
    %2895 = vmatpush1.msra.mxu0 %v2894
    %2896 = vmatprep.subr.mxu0 0.0
    %v2897 = vand.u32 %v2453, 4294901760
    %v2898 = vsub.f32 %v2453, %v2897
    %v2899 = vand.u32 %v2898, 4294901760
    %2900 = vmatpush1.msra.mxu0 %v2899
    %2901 = vmatprep.subr.mxu0 0.0
    %v2902 = vand.u32 %v2452, 4294901760
    %v2903 = vsub.f32 %v2452, %v2902
    %v2904 = vand.u32 %v2903, 4294901760
    %2905 = vmatpush1.msra.mxu0 %v2904
    %2906 = vmatprep.subr.mxu0 0.0
    %v2907 = vand.u32 %v2451, 4294901760
    %v2908 = vsub.f32 %v2451, %v2907
    %v2909 = vand.u32 %v2908, 4294901760
    %2910 = vmatpush1.msra.mxu0 %v2909
    %2911 = vmatprep.subr.mxu0 0.0
    %v2912 = vand.u32 %v2450, 4294901760
    %v2913 = vsub.f32 %v2450, %v2912
    %v2914 = vand.u32 %v2913, 4294901760
    %2915 = vmatpush1.msra.mxu0 %v2914
    %2916 = vmatprep.subr.mxu0 0.0
    %v2917 = vand.u32 %v2449, 4294901760
    %v2918 = vsub.f32 %v2449, %v2917
    %v2919 = vand.u32 %v2918, 4294901760
    %2920 = vmatpush1.msra.mxu0 %v2919
    %2921 = vmatprep.subr.mxu0 0.0
    %v2922 = vand.u32 %v2448, 4294901760
    %v2923 = vsub.f32 %v2448, %v2922
    %v2924 = vand.u32 %v2923, 4294901760
    %2925 = vmatpush1.msra.mxu0 %v2924
    %2926 = vmatprep.subr.mxu0 0.0
    %v2927 = vand.u32 %v2447, 4294901760
    %v2928 = vsub.f32 %v2447, %v2927
    %v2929 = vand.u32 %v2928, 4294901760
    %2930 = vmatpush1.msra.mxu0 %v2929
    %2931 = vmatprep.subr.mxu0 0.0
    %v2932 = vand.u32 %v2446, 4294901760
    %v2933 = vsub.f32 %v2446, %v2932
    %v2934 = vand.u32 %v2933, 4294901760
    %2935 = vmatpush1.msra.mxu0 %v2934
    %2936 = vmatprep.subr.mxu0 0.0
    %v2937 = vand.u32 %v2445, 4294901760
    %v2938 = vsub.f32 %v2445, %v2937
    %v2939 = vand.u32 %v2938, 4294901760
    %2940 = vmatpush1.msra.mxu0 %v2939
    %2941 = vmatprep.subr.mxu0 0.0
    %v2942 = vand.u32 %v2444, 4294901760
    %v2943 = vsub.f32 %v2444, %v2942
    %v2944 = vand.u32 %v2943, 4294901760
    %2945 = vmatpush1.msra.mxu0 %v2944
    %2946 = vmatprep.subr.mxu0 0.0
    %v2947 = vand.u32 %v2443, 4294901760
    %v2948 = vsub.f32 %v2443, %v2947
    %v2949 = vand.u32 %v2948, 4294901760
    %2950 = vmatpush1.msra.mxu0 %v2949
    %2951 = vmatprep.subr.mxu0 0.0
    %v2952 = vand.u32 %v2442, 4294901760
    %v2953 = vsub.f32 %v2442, %v2952
    %v2954 = vand.u32 %v2953, 4294901760
    %2955 = vmatpush1.msra.mxu0 %v2954
    %2956 = vmatprep.subr.mxu0 0.0
    %v2957 = vand.u32 %v2441, 4294901760
    %v2958 = vsub.f32 %v2441, %v2957
    %v2959 = vand.u32 %v2958, 4294901760
    %2960 = vmatpush1.msra.mxu0 %v2959
    %2961 = vmatprep.subr.mxu0 0.0
    %v2962 = vand.u32 %v2440, 4294901760
    %v2963 = vsub.f32 %v2440, %v2962
    %v2964 = vand.u32 %v2963, 4294901760
    %2965 = vmatpush1.msra.mxu0 %v2964
    %2966 = vmatprep.subr.mxu0 0.0
    %v2967 = vand.u32 %v2439, 4294901760
    %v2968 = vsub.f32 %v2439, %v2967
    %v2969 = vand.u32 %v2968, 4294901760
    %2970 = vmatpush1.msra.mxu0 %v2969
    %2971 = vmatprep.subr.mxu0 0.0
    %2972 = vmatpush2.msra.mxu0 0.0
    %2973 = vmatprep.subr.mxu0 0.0
    %2974 = vmatpush2.msra.mxu0 0.0
    %2975 = vmatprep.subr.mxu0 0.0
    %2976 = vmatpush2.msra.mxu0 0.0
    %2977 = vmatprep.subr.mxu0 0.0
    %2978 = vmatpush2.msra.mxu0 0.0
    %2979 = vmatprep.subr.mxu0 0.0
    %2980 = vmatpush2.msra.mxu0 0.0
    %2981 = vmatprep.subr.mxu0 0.0
    %2982 = vmatpush2.msra.mxu0 0.0
    %2983 = vmatprep.subr.mxu0 0.0
    %2984 = vmatpush2.msra.mxu0 0.0
    %2985 = vmatprep.subr.mxu0 0.0
    %2986 = vmatpush2.msra.mxu0 0.0
    %2987 = vmatprep.subr.mxu0 0.0
    %2988 = vmatpush2.msra.mxu0 0.0
    %2989 = vmatprep.subr.mxu0 0.0
    %2990 = vmatpush2.msra.mxu0 0.0
    %2991 = vmatprep.subr.mxu0 0.0
    %2992 = vmatpush2.msra.mxu0 0.0
    %2993 = vmatprep.subr.mxu0 0.0
    %2994 = vmatpush2.msra.mxu0 0.0
    %2995 = vmatprep.subr.mxu0 0.0
    %2996 = vmatpush2.msra.mxu0 0.0
    %2997 = vmatprep.subr.mxu0 0.0
    %2998 = vmatpush2.msra.mxu0 0.0
    %2999 = vmatprep.subr.mxu0 0.0
    %3000 = vmatpush2.msra.mxu0 0.0
    %3001 = vmatprep.subr.mxu0 0.0
    %3002 = vmatpush2.msra.mxu0 0.0
    %3003 = vmatprep.mubr.f32.mxu0 0.0
    %v3004 = vand.u32 %v2438, 4294901760
    %3005 = vmatmul.mubr.f32.gmra.mxu0 %v3004
    %v3006 = vpop.f32.mrf.mxu0
    %v3007 = vadd.f32 %v2888, %v3006
    %v3008 = vpop.f32.mrf.mxu0
    %3009 = vdwg.mxu0
    %3010 = vmatprep.subr.mxu0 0.0
    %v3011 = vand.u32 %v2454, 4294901760
    %3012 = vmatpush1.msra.mxu0 %v3011
    %3013 = vmatprep.subr.mxu0 0.0
    %v3014 = vand.u32 %v2453, 4294901760
    %3015 = vmatpush1.msra.mxu0 %v3014
    %3016 = vmatprep.subr.mxu0 0.0
    %v3017 = vand.u32 %v2452, 4294901760
    %3018 = vmatpush1.msra.mxu0 %v3017
    %3019 = vmatprep.subr.mxu0 0.0
    %v3020 = vand.u32 %v2451, 4294901760
    %3021 = vmatpush1.msra.mxu0 %v3020
    %3022 = vmatprep.subr.mxu0 0.0
    %v3023 = vand.u32 %v2450, 4294901760
    %3024 = vmatpush1.msra.mxu0 %v3023
    %3025 = vmatprep.subr.mxu0 0.0
    %v3026 = vand.u32 %v2449, 4294901760
    %3027 = vmatpush1.msra.mxu0 %v3026
    %3028 = vmatprep.subr.mxu0 0.0
    %v3029 = vand.u32 %v2448, 4294901760
    %3030 = vmatpush1.msra.mxu0 %v3029
    %3031 = vmatprep.subr.mxu0 0.0
    %v3032 = vand.u32 %v2447, 4294901760
    %3033 = vmatpush1.msra.mxu0 %v3032
    %3034 = vmatprep.subr.mxu0 0.0
    %v3035 = vand.u32 %v2446, 4294901760
    %3036 = vmatpush1.msra.mxu0 %v3035
    %3037 = vmatprep.subr.mxu0 0.0
    %v3038 = vand.u32 %v2445, 4294901760
    %3039 = vmatpush1.msra.mxu0 %v3038
    %3040 = vmatprep.subr.mxu0 0.0
    %v3041 = vand.u32 %v2444, 4294901760
    %3042 = vmatpush1.msra.mxu0 %v3041
    %3043 = vmatprep.subr.mxu0 0.0
    %v3044 = vand.u32 %v2443, 4294901760
    %3045 = vmatpush1.msra.mxu0 %v3044
    %3046 = vmatprep.subr.mxu0 0.0
    %v3047 = vand.u32 %v2442, 4294901760
    %3048 = vmatpush1.msra.mxu0 %v3047
    %3049 = vmatprep.subr.mxu0 0.0
    %v3050 = vand.u32 %v2441, 4294901760
    %3051 = vmatpush1.msra.mxu0 %v3050
    %3052 = vmatprep.subr.mxu0 0.0
    %v3053 = vand.u32 %v2440, 4294901760
    %3054 = vmatpush1.msra.mxu0 %v3053
    %3055 = vmatprep.subr.mxu0 0.0
    %v3056 = vand.u32 %v2439, 4294901760
    %3057 = vmatpush1.msra.mxu0 %v3056
    %3058 = vmatprep.subr.mxu0 0.0
    %3059 = vmatpush2.msra.mxu0 0.0
    %3060 = vmatprep.subr.mxu0 0.0
    %3061 = vmatpush2.msra.mxu0 0.0
    %3062 = vmatprep.subr.mxu0 0.0
    %3063 = vmatpush2.msra.mxu0 0.0
    %3064 = vmatprep.subr.mxu0 0.0
    %3065 = vmatpush2.msra.mxu0 0.0
    %3066 = vmatprep.subr.mxu0 0.0
    %3067 = vmatpush2.msra.mxu0 0.0
    %3068 = vmatprep.subr.mxu0 0.0
    %3069 = vmatpush2.msra.mxu0 0.0
    %3070 = vmatprep.subr.mxu0 0.0
    %3071 = vmatpush2.msra.mxu0 0.0
    %3072 = vmatprep.subr.mxu0 0.0
    %3073 = vmatpush2.msra.mxu0 0.0
    %3074 = vmatprep.subr.mxu0 0.0
    %3075 = vmatpush2.msra.mxu0 0.0
    %3076 = vmatprep.subr.mxu0 0.0
    %3077 = vmatpush2.msra.mxu0 0.0
    %3078 = vmatprep.subr.mxu0 0.0
    %3079 = vmatpush2.msra.mxu0 0.0
    %3080 = vmatprep.subr.mxu0 0.0
    %3081 = vmatpush2.msra.mxu0 0.0
    %3082 = vmatprep.subr.mxu0 0.0
    %3083 = vmatpush2.msra.mxu0 0.0
    %3084 = vmatprep.subr.mxu0 0.0
    %3085 = vmatpush2.msra.mxu0 0.0
    %3086 = vmatprep.subr.mxu0 0.0
    %3087 = vmatpush2.msra.mxu0 0.0
    %3088 = vmatprep.subr.mxu0 0.0
    %3089 = vmatpush2.msra.mxu0 0.0
    %3090 = vmatprep.mubr.f32.mxu0 0.0
    %v3091 = vand.u32 %v2438, 4294901760
    %3092 = vmatmul.mubr.f32.gmra.mxu0 %v3091
    %v3093 = vpop.f32.mrf.mxu0
    %v3094 = vadd.f32 %v3007, %v3093
    %v3095 = vpop.f32.mrf.mxu0
    %3096 = vdwg.mxu0
    %3097 = vst [vmem:[%s5] sm:$0xff] %v3094
    // Predicated region
    $region26: #{critic_forward.1} parent=1 // pred_check
      _
    $region27: #{critic_forward.1} parent=1 // pred_check_branch
      %3099 = sbr.rel (0) target = $region29
    $region28: #{critic_forward.1} parent=1 // pred_region
      _
    $region29: #{critic_forward.1} parent=1 // pred_fallthru
      _
    // Predicated region
    $region30: #{critic_forward.1} parent=1 // pred_check
      _
    $region31: #{critic_forward.1} parent=1 // pred_check_branch
      %3101 = sbr.rel (0) target = $region33
    $region32: #{critic_forward.1} parent=1 // pred_region
      _
    $region33: #{critic_forward.1} parent=1 // pred_fallthru
      _
    %3102 = vsyncpa [#allocation3], 1

</llo_original>
